<compile_context>
chip_gen: v7x
topology: tpu7x:2x2x1
jax: 0.10.0
libtpu: 0.0.40
codegen_flags: <defaults>
</compile_context>

<pallas_src>
import functools

import numpy as np
import jax
import jax.numpy as jnp
from jax.experimental import pallas as pl
from jax.experimental.pallas import tpu as pltpu


# ----------------------------------------------------------------------------
# helpers
# ----------------------------------------------------------------------------
def _round_up(x, m):
    return ((x + m - 1) // m) * m


def _pick_ray_tile(n_rays, n_samples, target_points=8192):
    """Largest ray tile TR that is a multiple of 8, divides n_rays, gives >=2 grid
    steps (megacore on v7x), and keeps TR * n_samples near `target_points` so the
    double-buffered blocks stay small on v7x's 64 MiB VMEM.  Falls back to the whole
    ray axis (grid of 1) if no such divisor exists."""
    cap = max(8, target_points // max(1, n_samples))
    hi = min(cap, n_rays // 2)
    best = None
    for t in range(8, hi + 1, 8):
        if n_rays % t == 0:
            best = t
    return best if best is not None else n_rays


# ----------------------------------------------------------------------------
# Fused kernel: sigma MLP  ->  raw2outputs volume rendering  ->  color MLP,
# one ray-tile (TR rays x N_s samples) per grid step.
# ----------------------------------------------------------------------------
def _fused_kernel(fts_ref, pts_ref, z_ref, rd_ref, dirs_ref,
                  w0f_ref, w0p_ref, w1_ref, w2_ref,
                  wc0_ref, wc1_ref, wc2_ref, wc3_ref,
                  packed_ref, weights_ref,
                  *, n_samples, geo_feat_dim, near_mask_thresh):
    f32 = jnp.float32
    S = n_samples
    F = geo_feat_dim

    # ---- sigma MLP over the tile's TR*S points (split first-layer matmul) -------
    h = (jnp.dot(fts_ref[...].astype(w0f_ref.dtype), w0f_ref[...],
                 preferred_element_type=f32)
         + jnp.dot(pts_ref[...].astype(w0p_ref.dtype), w0p_ref[...],
                   preferred_element_type=f32))
    h = jnp.maximum(h, 0.0)
    h = jnp.maximum(jnp.dot(h.astype(w1_ref.dtype), w1_ref[...],
                            preferred_element_type=f32), 0.0)
    raw = jnp.dot(h.astype(w2_ref.dtype), w2_ref[...],
                  preferred_element_type=f32)                      # (TR*S, 1+F)

    TR = raw.shape[0] // S
    raw3 = raw.reshape(TR, S, 1 + F)                               # (TR, S, 1+F)

    # ---- raw2outputs (volume rendering) ------------------------------------------
    z = z_ref[...].astype(f32)                                     # (TR, S)
    rd = rd_ref[...].astype(f32)                                   # (TR, 3)
    ray_norm = jnp.sqrt(jnp.sum(rd * rd, axis=-1, keepdims=True))  # (TR, 1)
    dists = (z[:, 1:] - z[:, :-1]) * ray_norm                      # (TR, S-1)

    rgb = jax.nn.sigmoid(raw3[:, :, 1:])                           # (TR, S, F) rgb_activate
    density = jnp.maximum(raw3[:, :S - 1, 0], 0.0)                 # (TR, S-1)  sigma_activate
    if near_mask_thresh is not None:
        density = density * (z[:, 1:] > near_mask_thresh).astype(f32)

    alpha = 1.0 - jnp.exp(-density * dists)                        # (TR, S-1)
    alpha = jnp.concatenate([alpha, jnp.ones_like(alpha[:, :1])], axis=-1)  # (TR, S)

    # exclusive prefix product of t = (1 - alpha + 1e-10) along samples via a
    # log-step scan (ceil(log2(S)) shift+mul steps, lane slices + concat only).
    t = 1.0 - alpha + 1e-10

    def _shift_right_fill1(x, d):
        return jnp.concatenate([jnp.ones_like(x[:, :d]), x[:, :S - d]], axis=-1)

    incl = t
    d = 1
    while d < S:
        incl = incl * _shift_right_fill1(incl, d)
        d *= 2
    trans = _shift_right_fill1(incl, 1)                            # exclusive cumprod
    weights = alpha * trans                                        # (TR, S)

    feat = jnp.sum(weights[:, :, None] * rgb, axis=1)              # (TR, F) == rgb_map
    depth = jnp.sum(weights * z, axis=-1, keepdims=True)           # (TR, 1)
    acc = jnp.sum(weights, axis=-1, keepdims=True)                 # (TR, 1)

    # ---- color MLP: 4 bias-free Linear layers, ReLU between, sigmoid at end ------
    hc = jnp.concatenate([feat, dirs_ref[...].astype(f32)], axis=-1)
    hc = jnp.maximum(jnp.dot(hc.astype(wc0_ref.dtype), wc0_ref[...],
                             preferred_element_type=f32), 0.0)
    hc = jnp.maximum(jnp.dot(hc.astype(wc1_ref.dtype), wc1_ref[...],
                             preferred_element_type=f32), 0.0)
    hc = jnp.maximum(jnp.dot(hc.astype(wc2_ref.dtype), wc2_ref[...],
                             preferred_element_type=f32), 0.0)
    color = jax.nn.sigmoid(jnp.dot(hc.astype(wc3_ref.dtype), wc3_ref[...],
                                   preferred_element_type=f32))    # (TR, 3)

    # ---- lane-dense packed store: [color(3) | depth(1) | acc(1) | feat(F) | 0] ----
    pieces = [color, depth, acc, feat]
    pad = packed_ref.shape[-1] - (3 + 1 + 1 + F)
    if pad > 0:
        pieces.append(jnp.zeros((color.shape[0], pad), f32))
    packed_ref[...] = jnp.concatenate(pieces, axis=-1)
    weights_ref[...] = weights


# ----------------------------------------------------------------------------
# Parameter init (deterministic, PyTorch nn.Linear-style uniform bounds).
# ----------------------------------------------------------------------------
def init_params(key, *, input_ch=32, input_ch_views=3, hidden_dim=64,
                geo_feat_dim=15, hidden_dim_color=64, dtype=jnp.float32):
    ks = jax.random.split(key, 7)

    def lin(k, fan_in, fan_out):
        bound = 1.0 / np.sqrt(fan_in)
        return jax.random.uniform(k, (fan_in, fan_out), jnp.float32,
                                  -bound, bound).astype(dtype)

    return {
        "sigma_w0": lin(ks[0], input_ch, hidden_dim),
        "sigma_w1": lin(ks[1], hidden_dim, hidden_dim),
        "sigma_w2": lin(ks[2], hidden_dim, 1 + geo_feat_dim),
        "color_w0": lin(ks[3], input_ch_views + geo_feat_dim, hidden_dim_color),
        "color_w1": lin(ks[4], hidden_dim_color, hidden_dim_color),
        "color_w2": lin(ks[5], hidden_dim_color, hidden_dim_color),
        "color_w3": lin(ks[6], hidden_dim_color, 3),
    }


# ----------------------------------------------------------------------------
# Wrapper == VoxelNeRFBase.forward (composite_feature=True).
# ----------------------------------------------------------------------------
def voxelnerf_forward(pts, viewdirs, fts, z_vals, rays_d, params,
                      raw_noise_std=0.0, is_train=False, render_rmnearplane=0):
    # TODO(synk): raw_noise_std > 0 (training-time torch.randn density noise) not implemented.
    assert raw_noise_std == 0.0

    N_r, N_s, Dp = pts.shape
    P = N_r * N_s
    Df = fts.shape[-1]
    Ddir = viewdirs.shape[-1]
    H = params["sigma_w0"].shape[1]
    Fgeo = params["sigma_w2"].shape[1] - 1
    Hc = params["color_w0"].shape[1]

    # MXU-operand dtype follows the params (bf16 params => bf16 MXU on v6e/v7x);
    # all element-wise rendering math inside the kernel stays f32 (v5e-friendly).
    mxu_dtype = params["sigma_w0"].dtype

    # pts_embed / dirs_embed are identity; flatten points in the wrapper (cheap XLA
    # reshape) so the kernel sees lane-aligned 2-D blocks.
    fts2 = fts.reshape(P, Df).astype(mxu_dtype)
    pts2 = pts.reshape(P, Dp).astype(mxu_dtype)
    z = z_vals.astype(jnp.float32)
    rd = rays_d.astype(jnp.float32)
    dirs = viewdirs.reshape(N_r, Ddir).astype(jnp.float32)

    # Split sigma layer-0 weight so no (P, Df+Dp) concat is ever materialized.
    w0f = params["sigma_w0"][:Df]
    w0p = params["sigma_w0"][Df:]

    near_thresh = None
    if (not is_train) and render_rmnearplane > 0:
        near_thresh = float(render_rmnearplane) / 128.0

    TR = _pick_ray_tile(N_r, N_s)          # multiple of 8 (or N_r), divides N_r
    n_tiles = N_r // TR
    OUTP = _round_up(3 + 1 + 1 + Fgeo, 128)  # lane-dense packed output width

    kernel = functools.partial(_fused_kernel, n_samples=N_s, geo_feat_dim=Fgeo,
                               near_mask_thresh=near_thresh)

    packed, weights = pl.pallas_call(
        kernel,
        out_shape=(
            jax.ShapeDtypeStruct((N_r, OUTP), jnp.float32),
            jax.ShapeDtypeStruct((N_r, N_s), jnp.float32),
        ),
        grid=(n_tiles,),
        in_specs=[
            pl.BlockSpec((TR * N_s, Df), lambda i: (i, 0)),   # fts (flat points)
            pl.BlockSpec((TR * N_s, Dp), lambda i: (i, 0)),   # pts (flat points)
            pl.BlockSpec((TR, N_s), lambda i: (i, 0)),        # z_vals
            pl.BlockSpec((TR, 3), lambda i: (i, 0)),          # rays_d
            pl.BlockSpec((TR, Ddir), lambda i: (i, 0)),       # viewdirs
            pl.BlockSpec((Df, H), lambda i: (0, 0)),          # sigma W0 (fts part)
            pl.BlockSpec((Dp, H), lambda i: (0, 0)),          # sigma W0 (pts part)
            pl.BlockSpec((H, H), lambda i: (0, 0)),           # sigma W1
            pl.BlockSpec((H, 1 + Fgeo), lambda i: (0, 0)),    # sigma W2
            pl.BlockSpec((Fgeo + Ddir, Hc), lambda i: (0, 0)),  # color W0
            pl.BlockSpec((Hc, Hc), lambda i: (0, 0)),         # color W1
            pl.BlockSpec((Hc, Hc), lambda i: (0, 0)),         # color W2
            pl.BlockSpec((Hc, 3), lambda i: (0, 0)),          # color W3
        ],
        out_specs=(
            pl.BlockSpec((TR, OUTP), lambda i: (i, 0)),
            pl.BlockSpec((TR, N_s), lambda i: (i, 0)),
        ),
        compiler_params=pltpu.CompilerParams(dimension_semantics=("parallel",)),
    )(fts2, pts2, z, rd, dirs,
      w0f, w0p, params["sigma_w1"], params["sigma_w2"],
      params["color_w0"], params["color_w1"], params["color_w2"], params["color_w3"])

    color = packed[:, 0:3]
    depth_map = packed[:, 3]
    acc_map = packed[:, 4]
    feature_map = packed[:, 5:5 + Fgeo]
    # Same tuple as the PyTorch forward (composite_feature=True).
    return color, depth_map, acc_map, weights, feature_map


# ----------------------------------------------------------------------------
# Pure-JAX reference (mirrors the PyTorch forward) for a correctness check.
# ----------------------------------------------------------------------------
def _ref_forward(pts, viewdirs, fts, z_vals, rays_d, params):
    N_r, N_s, _ = pts.shape
    P = N_r * N_s
    x = jnp.concatenate([fts.reshape(P, -1), pts.reshape(P, -1)], -1)
    h = jnp.maximum(x @ params["sigma_w0"], 0.0)
    h = jnp.maximum(h @ params["sigma_w1"], 0.0)
    h = h @ params["sigma_w2"]
    raw = h.reshape(N_r, N_s, -1)

    dists = z_vals[:, 1:] - z_vals[:, :-1]
    dists = dists * jnp.linalg.norm(rays_d, axis=-1, keepdims=True)
    rgb = jax.nn.sigmoid(raw[..., 1:])
    density = jnp.maximum(raw[:, :-1, 0], 0.0)
    alpha = 1.0 - jnp.exp(-density * dists)
    alpha = jnp.concatenate([alpha, jnp.ones_like(alpha[:, :1])], -1)
    trans = jnp.cumprod(
        jnp.concatenate([jnp.ones((N_r, 1)), 1.0 - alpha + 1e-10], -1), -1)[:, :-1]
    weights = alpha * trans
    feat = jnp.sum(weights[..., None] * rgb, -2)
    depth = jnp.sum(weights * z_vals, -1)
    acc = jnp.sum(weights, -1)

    hc = jnp.concatenate([feat, viewdirs], -1)
    hc = jnp.maximum(hc @ params["color_w0"], 0.0)
    hc = jnp.maximum(hc @ params["color_w1"], 0.0)
    hc = jnp.maximum(hc @ params["color_w2"], 0.0)
    color = jax.nn.sigmoid(hc @ params["color_w3"])
    return color, depth, acc, weights, feat


if __name__ == "__main__":
    key = jax.random.PRNGKey(0)
    k_pts, k_dirs, k_fts, k_rd, k_param = jax.random.split(key, 5)

    N_rays, N_samples, fts_dim = 16, 8, 29          # input_ch = 29 + 3 = 32
    pts = jax.random.uniform(k_pts, (N_rays, N_samples, 3), jnp.float32, -1.0, 1.0)
    viewdirs = jax.random.normal(k_dirs, (N_rays, 3), jnp.float32)
    viewdirs = viewdirs / jnp.linalg.norm(viewdirs, axis=-1, keepdims=True)
    fts = jax.random.normal(k_fts, (N_rays, N_samples, fts_dim), jnp.float32)
    z_vals = jnp.broadcast_to(jnp.linspace(2.0, 6.0, N_samples, dtype=jnp.float32),
                              (N_rays, N_samples))
    rays_d = jax.random.normal(k_rd, (N_rays, 3), jnp.float32)

    params = init_params(k_param, input_ch=fts_dim + 3)

    outs = voxelnerf_forward(pts, viewdirs, fts, z_vals, rays_d, params,
                             raw_noise_std=0.0, is_train=False)
    outs = jax.block_until_ready(outs)

    refs = _ref_forward(pts, viewdirs, fts, z_vals, rays_d, params)
    names = ["color", "depth_map", "acc_map", "weights", "feature_map"]
    for name, o, r in zip(names, outs, refs):
        assert o.shape == r.shape, (name, o.shape, r.shape)
        np.testing.assert_allclose(np.asarray(o), np.asarray(r), rtol=2e-3, atol=2e-3)

    print("KERNEL_OK")
</pallas_src>

<mosaic_0001>
module attributes {stable_mosaic.version = 11 : i64} {
  func.func @_fused_kernel(%arg0: i32, %arg1: memref<64x29xf32, #tpu.memory_space<vmem>>, %arg2: memref<64x3xf32, #tpu.memory_space<vmem>>, %arg3: memref<8x8xf32, #tpu.memory_space<vmem>>, %arg4: memref<8x3xf32, #tpu.memory_space<vmem>>, %arg5: memref<8x3xf32, #tpu.memory_space<vmem>>, %arg6: memref<29x64xf32, #tpu.memory_space<vmem>>, %arg7: memref<3x64xf32, #tpu.memory_space<vmem>>, %arg8: memref<64x64xf32, #tpu.memory_space<vmem>>, %arg9: memref<64x16xf32, #tpu.memory_space<vmem>>, %arg10: memref<18x64xf32, #tpu.memory_space<vmem>>, %arg11: memref<64x64xf32, #tpu.memory_space<vmem>>, %arg12: memref<64x64xf32, #tpu.memory_space<vmem>>, %arg13: memref<64x3xf32, #tpu.memory_space<vmem>>, %arg14: memref<8x128xf32, #tpu.memory_space<vmem>>, %arg15: memref<8x8xf32, #tpu.memory_space<vmem>>) attributes {dimension_semantics = [#tpu.dimension_semantics<parallel>], iteration_bounds = array<i64: 2>, scalar_prefetch = 0 : i64, scratch_operands = 0 : i64, tpu.core_type = #tpu.core_type<tc>, window_params = [{transform_indices = @transform_0, window_bounds = array<i64: 64, 29>}, {transform_indices = @transform_1, window_bounds = array<i64: 64, 3>}, {transform_indices = @transform_2, window_bounds = array<i64: 8, 8>}, {transform_indices = @transform_3, window_bounds = array<i64: 8, 3>}, {transform_indices = @transform_4, window_bounds = array<i64: 8, 3>}, {pipeline_mode = #tpu.pipeline_mode<synchronous>, transform_indices = @transform_5, window_bounds = array<i64: 29, 64>}, {pipeline_mode = #tpu.pipeline_mode<synchronous>, transform_indices = @transform_6, window_bounds = array<i64: 3, 64>}, {pipeline_mode = #tpu.pipeline_mode<synchronous>, transform_indices = @transform_7, window_bounds = array<i64: 64, 64>}, {pipeline_mode = #tpu.pipeline_mode<synchronous>, transform_indices = @transform_8, window_bounds = array<i64: 64, 16>}, {pipeline_mode = #tpu.pipeline_mode<synchronous>, transform_indices = @transform_9, window_bounds = array<i64: 18, 64>}, {pipeline_mode = #tpu.pipeline_mode<synchronous>, transform_indices = @transform_10, window_bounds = array<i64: 64, 64>}, {pipeline_mode = #tpu.pipeline_mode<synchronous>, transform_indices = @transform_11, window_bounds = array<i64: 64, 64>}, {pipeline_mode = #tpu.pipeline_mode<synchronous>, transform_indices = @transform_12, window_bounds = array<i64: 64, 3>}, {transform_indices = @transform_13, window_bounds = array<i64: 8, 128>}, {transform_indices = @transform_14, window_bounds = array<i64: 8, 8>}]} {
    %c0 = arith.constant 0 : index
    %c0_0 = arith.constant 0 : index
    %0 = vector.load %arg1[%c0, %c0_0] : memref<64x29xf32, #tpu.memory_space<vmem>>, vector<64x29xf32>
    %c0_1 = arith.constant 0 : index
    %c0_2 = arith.constant 0 : index
    %1 = vector.load %arg6[%c0_1, %c0_2] : memref<29x64xf32, #tpu.memory_space<vmem>>, vector<29x64xf32>
    %cst = arith.constant dense<0.000000e+00> : vector<64x64xf32>
    %2 = tpu.matmul %0, %1, %cst {dimension_numbers = #tpu.dot_dimension_numbers<[1], [0], [0], [1], [0, 0, 1, 1], [], []>} : vector<64x29xf32>, vector<29x64xf32>, vector<64x64xf32> -> vector<64x64xf32>
    %c0_3 = arith.constant 0 : index
    %c0_4 = arith.constant 0 : index
    %3 = vector.load %arg2[%c0_3, %c0_4] : memref<64x3xf32, #tpu.memory_space<vmem>>, vector<64x3xf32>
    %c0_5 = arith.constant 0 : index
    %c0_6 = arith.constant 0 : index
    %4 = vector.load %arg7[%c0_5, %c0_6] : memref<3x64xf32, #tpu.memory_space<vmem>>, vector<3x64xf32>
    %cst_7 = arith.constant dense<0.000000e+00> : vector<64x64xf32>
    %5 = tpu.matmul %3, %4, %cst_7 {dimension_numbers = #tpu.dot_dimension_numbers<[1], [0], [0], [1], [0, 0, 1, 1], [], []>} : vector<64x3xf32>, vector<3x64xf32>, vector<64x64xf32> -> vector<64x64xf32>
    %6 = arith.addf %2, %5 : vector<64x64xf32>
    %cst_8 = arith.constant 0.000000e+00 : f32
    %7 = vector.broadcast %cst_8 : f32 to vector<64x64xf32>
    %8 = arith.maximumf %6, %7 : vector<64x64xf32>
    %c0_9 = arith.constant 0 : index
    %c0_10 = arith.constant 0 : index
    %9 = vector.load %arg8[%c0_9, %c0_10] : memref<64x64xf32, #tpu.memory_space<vmem>>, vector<64x64xf32>
    %cst_11 = arith.constant dense<0.000000e+00> : vector<64x64xf32>
    %10 = tpu.matmul %8, %9, %cst_11 {dimension_numbers = #tpu.dot_dimension_numbers<[1], [0], [0], [1], [0, 0, 1, 1], [], []>} : vector<64x64xf32>, vector<64x64xf32>, vector<64x64xf32> -> vector<64x64xf32>
    %cst_12 = arith.constant 0.000000e+00 : f32
    %11 = vector.broadcast %cst_12 : f32 to vector<64x64xf32>
    %12 = arith.maximumf %10, %11 : vector<64x64xf32>
    %c0_13 = arith.constant 0 : index
    %c0_14 = arith.constant 0 : index
    %13 = vector.load %arg9[%c0_13, %c0_14] : memref<64x16xf32, #tpu.memory_space<vmem>>, vector<64x16xf32>
    %cst_15 = arith.constant dense<0.000000e+00> : vector<64x16xf32>
    %14 = tpu.matmul %12, %13, %cst_15 {dimension_numbers = #tpu.dot_dimension_numbers<[1], [0], [0], [1], [0, 0, 1, 1], [], []>} : vector<64x64xf32>, vector<64x16xf32>, vector<64x16xf32> -> vector<64x16xf32>
    %15 = vector.shape_cast %14 : vector<64x16xf32> to vector<8x8x16xf32>
    %c0_16 = arith.constant 0 : index
    %c0_17 = arith.constant 0 : index
    %16 = vector.load %arg3[%c0_16, %c0_17] : memref<8x8xf32, #tpu.memory_space<vmem>>, vector<8x8xf32>
    %c0_18 = arith.constant 0 : index
    %c0_19 = arith.constant 0 : index
    %17 = vector.load %arg4[%c0_18, %c0_19] : memref<8x3xf32, #tpu.memory_space<vmem>>, vector<8x3xf32>
    %18 = arith.mulf %17, %17 : vector<8x3xf32>
    %cst_20 = arith.constant dense<0.000000e+00> : vector<8xf32>
    %19 = vector.multi_reduction <add>, %18, %cst_20 [1] : vector<8x3xf32> to vector<8xf32>
    %20 = vector.shape_cast %19 : vector<8xf32> to vector<8x1xf32>
    %21 = math.sqrt %20 : vector<8x1xf32>
    %22 = vector.extract_strided_slice %16 {offsets = [0, 1], sizes = [8, 7], strides = [1, 1]} : vector<8x8xf32> to vector<8x7xf32>
    %23 = vector.extract_strided_slice %16 {offsets = [0, 0], sizes = [8, 7], strides = [1, 1]} : vector<8x8xf32> to vector<8x7xf32>
    %24 = arith.subf %22, %23 : vector<8x7xf32>
    %25 = vector.broadcast %21 : vector<8x1xf32> to vector<8x7xf32>
    %26 = arith.mulf %24, %25 : vector<8x7xf32>
    %27 = vector.extract_strided_slice %15 {offsets = [0, 0, 1], sizes = [8, 8, 15], strides = [1, 1, 1]} : vector<8x8x16xf32> to vector<8x8x15xf32>
    %28 = arith.negf %27 : vector<8x8x15xf32>
    %29 = math.exp %28 : vector<8x8x15xf32>
    %cst_21 = arith.constant 1.000000e+00 : f32
    %30 = vector.broadcast %cst_21 : f32 to vector<8x8x15xf32>
    %31 = arith.addf %30, %29 : vector<8x8x15xf32>
    %32 = arith.divf %30, %31 : vector<8x8x15xf32>
    %33 = vector.extract_strided_slice %15 {offsets = [0, 0, 0], sizes = [8, 7, 1], strides = [1, 1, 1]} : vector<8x8x16xf32> to vector<8x7x1xf32>
    %34 = vector.shape_cast %33 : vector<8x7x1xf32> to vector<8x7xf32>
    %cst_22 = arith.constant 0.000000e+00 : f32
    %35 = vector.broadcast %cst_22 : f32 to vector<8x7xf32>
    %36 = arith.maximumf %34, %35 : vector<8x7xf32>
    %cst_23 = arith.constant 0.000000e+00 : f32
    %37 = vector.broadcast %cst_23 : f32 to vector<8x7xf32>
    %38 = arith.subf %37, %36 : vector<8x7xf32>
    %39 = arith.mulf %38, %26 : vector<8x7xf32>
    %40 = math.exp %39 : vector<8x7xf32>
    %cst_24 = arith.constant 1.000000e+00 : f32
    %41 = vector.broadcast %cst_24 : f32 to vector<8x7xf32>
    %42 = arith.subf %41, %40 : vector<8x7xf32>
    %cst_25 = arith.constant 1.000000e+00 : f32
    %43 = vector.broadcast %cst_25 : f32 to vector<8x1xf32>
    %44 = tpu.concatenate %42, %43 in 1 : vector<8x7xf32>, vector<8x1xf32> -> vector<8x8xf32>
    %cst_26 = arith.constant 1.000000e+00 : f32
    %45 = vector.broadcast %cst_26 : f32 to vector<8x8xf32>
    %46 = arith.subf %45, %44 : vector<8x8xf32>
    %cst_27 = arith.constant 1.000000e-10 : f32
    %47 = vector.broadcast %cst_27 : f32 to vector<8x8xf32>
    %48 = arith.addf %46, %47 : vector<8x8xf32>
    %cst_28 = arith.constant 1.000000e+00 : f32
    %49 = vector.broadcast %cst_28 : f32 to vector<8x1xf32>
    %50 = vector.extract_strided_slice %48 {offsets = [0, 0], sizes = [8, 7], strides = [1, 1]} : vector<8x8xf32> to vector<8x7xf32>
    %51 = tpu.concatenate %49, %50 in 1 : vector<8x1xf32>, vector<8x7xf32> -> vector<8x8xf32>
    %52 = arith.mulf %48, %51 : vector<8x8xf32>
    %cst_29 = arith.constant 1.000000e+00 : f32
    %53 = vector.broadcast %cst_29 : f32 to vector<8x2xf32>
    %54 = vector.extract_strided_slice %52 {offsets = [0, 0], sizes = [8, 6], strides = [1, 1]} : vector<8x8xf32> to vector<8x6xf32>
    %55 = tpu.concatenate %53, %54 in 1 : vector<8x2xf32>, vector<8x6xf32> -> vector<8x8xf32>
    %56 = arith.mulf %52, %55 : vector<8x8xf32>
    %cst_30 = arith.constant 1.000000e+00 : f32
    %57 = vector.broadcast %cst_30 : f32 to vector<8x4xf32>
    %58 = vector.extract_strided_slice %56 {offsets = [0, 0], sizes = [8, 4], strides = [1, 1]} : vector<8x8xf32> to vector<8x4xf32>
    %59 = tpu.concatenate %57, %58 in 1 : vector<8x4xf32>, vector<8x4xf32> -> vector<8x8xf32>
    %60 = arith.mulf %56, %59 : vector<8x8xf32>
    %cst_31 = arith.constant 1.000000e+00 : f32
    %61 = vector.broadcast %cst_31 : f32 to vector<8x1xf32>
    %62 = vector.extract_strided_slice %60 {offsets = [0, 0], sizes = [8, 7], strides = [1, 1]} : vector<8x8xf32> to vector<8x7xf32>
    %63 = tpu.concatenate %61, %62 in 1 : vector<8x1xf32>, vector<8x7xf32> -> vector<8x8xf32>
    %64 = arith.mulf %44, %63 : vector<8x8xf32>
    %65 = vector.shape_cast %64 : vector<8x8xf32> to vector<8x8x1xf32>
    %66 = vector.broadcast %65 : vector<8x8x1xf32> to vector<8x8x15xf32>
    %67 = arith.mulf %66, %32 : vector<8x8x15xf32>
    %cst_32 = arith.constant dense<0.000000e+00> : vector<8x15xf32>
    %68 = vector.multi_reduction <add>, %67, %cst_32 [1] : vector<8x8x15xf32> to vector<8x15xf32>
    %69 = arith.mulf %64, %16 : vector<8x8xf32>
    %cst_33 = arith.constant dense<0.000000e+00> : vector<8xf32>
    %70 = vector.multi_reduction <add>, %69, %cst_33 [1] : vector<8x8xf32> to vector<8xf32>
    %71 = vector.shape_cast %70 : vector<8xf32> to vector<8x1xf32>
    %cst_34 = arith.constant dense<0.000000e+00> : vector<8xf32>
    %72 = vector.multi_reduction <add>, %64, %cst_34 [1] : vector<8x8xf32> to vector<8xf32>
    %73 = vector.shape_cast %72 : vector<8xf32> to vector<8x1xf32>
    %c0_35 = arith.constant 0 : index
    %c0_36 = arith.constant 0 : index
    %74 = vector.load %arg5[%c0_35, %c0_36] : memref<8x3xf32, #tpu.memory_space<vmem>>, vector<8x3xf32>
    %75 = tpu.concatenate %68, %74 in 1 : vector<8x15xf32>, vector<8x3xf32> -> vector<8x18xf32>
    %c0_37 = arith.constant 0 : index
    %c0_38 = arith.constant 0 : index
    %76 = vector.load %arg10[%c0_37, %c0_38] : memref<18x64xf32, #tpu.memory_space<vmem>>, vector<18x64xf32>
    %cst_39 = arith.constant dense<0.000000e+00> : vector<8x64xf32>
    %77 = tpu.matmul %75, %76, %cst_39 {dimension_numbers = #tpu.dot_dimension_numbers<[1], [0], [0], [1], [0, 0, 1, 1], [], []>} : vector<8x18xf32>, vector<18x64xf32>, vector<8x64xf32> -> vector<8x64xf32>
    %cst_40 = arith.constant 0.000000e+00 : f32
    %78 = vector.broadcast %cst_40 : f32 to vector<8x64xf32>
    %79 = arith.maximumf %77, %78 : vector<8x64xf32>
    %c0_41 = arith.constant 0 : index
    %c0_42 = arith.constant 0 : index
    %80 = vector.load %arg11[%c0_41, %c0_42] : memref<64x64xf32, #tpu.memory_space<vmem>>, vector<64x64xf32>
    %cst_43 = arith.constant dense<0.000000e+00> : vector<8x64xf32>
    %81 = tpu.matmul %79, %80, %cst_43 {dimension_numbers = #tpu.dot_dimension_numbers<[1], [0], [0], [1], [0, 0, 1, 1], [], []>} : vector<8x64xf32>, vector<64x64xf32>, vector<8x64xf32> -> vector<8x64xf32>
    %cst_44 = arith.constant 0.000000e+00 : f32
    %82 = vector.broadcast %cst_44 : f32 to vector<8x64xf32>
    %83 = arith.maximumf %81, %82 : vector<8x64xf32>
    %c0_45 = arith.constant 0 : index
    %c0_46 = arith.constant 0 : index
    %84 = vector.load %arg12[%c0_45, %c0_46] : memref<64x64xf32, #tpu.memory_space<vmem>>, vector<64x64xf32>
    %cst_47 = arith.constant dense<0.000000e+00> : vector<8x64xf32>
    %85 = tpu.matmul %83, %84, %cst_47 {dimension_numbers = #tpu.dot_dimension_numbers<[1], [0], [0], [1], [0, 0, 1, 1], [], []>} : vector<8x64xf32>, vector<64x64xf32>, vector<8x64xf32> -> vector<8x64xf32>
    %cst_48 = arith.constant 0.000000e+00 : f32
    %86 = vector.broadcast %cst_48 : f32 to vector<8x64xf32>
    %87 = arith.maximumf %85, %86 : vector<8x64xf32>
    %c0_49 = arith.constant 0 : index
    %c0_50 = arith.constant 0 : index
    %88 = vector.load %arg13[%c0_49, %c0_50] : memref<64x3xf32, #tpu.memory_space<vmem>>, vector<64x3xf32>
    %cst_51 = arith.constant dense<0.000000e+00> : vector<8x3xf32>
    %89 = tpu.matmul %87, %88, %cst_51 {dimension_numbers = #tpu.dot_dimension_numbers<[1], [0], [0], [1], [0, 0, 1, 1], [], []>} : vector<8x64xf32>, vector<64x3xf32>, vector<8x3xf32> -> vector<8x3xf32>
    %90 = arith.negf %89 : vector<8x3xf32>
    %91 = math.exp %90 : vector<8x3xf32>
    %cst_52 = arith.constant 1.000000e+00 : f32
    %92 = vector.broadcast %cst_52 : f32 to vector<8x3xf32>
    %93 = arith.addf %92, %91 : vector<8x3xf32>
    %94 = arith.divf %92, %93 : vector<8x3xf32>
    %cst_53 = arith.constant 0.000000e+00 : f32
    %95 = vector.broadcast %cst_53 : f32 to vector<8x108xf32>
    %96 = tpu.concatenate %94, %71, %73, %68, %95 in 1 : vector<8x3xf32>, vector<8x1xf32>, vector<8x1xf32>, vector<8x15xf32>, vector<8x108xf32> -> vector<8x128xf32>
    %c0_54 = arith.constant 0 : index
    %c0_55 = arith.constant 0 : index
    %97 = vector.load %arg14[%c0_54, %c0_55] : memref<8x128xf32, #tpu.memory_space<vmem>>, vector<8x128xf32>
    tpu.vector_store %arg14[%c0_54, %c0_55], %96 {strides = array<i32>} : memref<8x128xf32, #tpu.memory_space<vmem>>, vector<8x128xf32>,
    %c0_56 = arith.constant 0 : index
    %c0_57 = arith.constant 0 : index
    %98 = vector.load %arg15[%c0_56, %c0_57] : memref<8x8xf32, #tpu.memory_space<vmem>>, vector<8x8xf32>
    tpu.vector_store %arg15[%c0_56, %c0_57], %64 {strides = array<i32>} : memref<8x8xf32, #tpu.memory_space<vmem>>, vector<8x8xf32>,
    return
  }
  func.func @transform_0(%arg0: i32) -> (i32, i32) {
    %c0_i32 = arith.constant 0 : i32
    %c0_i32_0 = arith.constant 0 : i32
    return %arg0, %c0_i32 : i32, i32
  }
  func.func @transform_1(%arg0: i32) -> (i32, i32) {
    %c0_i32 = arith.constant 0 : i32
    %c0_i32_0 = arith.constant 0 : i32
    return %arg0, %c0_i32 : i32, i32
  }
  func.func @transform_2(%arg0: i32) -> (i32, i32) {
    %c0_i32 = arith.constant 0 : i32
    %c0_i32_0 = arith.constant 0 : i32
    return %arg0, %c0_i32 : i32, i32
  }
  func.func @transform_3(%arg0: i32) -> (i32, i32) {
    %c0_i32 = arith.constant 0 : i32
    %c0_i32_0 = arith.constant 0 : i32
    return %arg0, %c0_i32 : i32, i32
  }
  func.func @transform_4(%arg0: i32) -> (i32, i32) {
    %c0_i32 = arith.constant 0 : i32
    %c0_i32_0 = arith.constant 0 : i32
    return %arg0, %c0_i32 : i32, i32
  }
  func.func @transform_5(%arg0: i32) -> (i32, i32) {
    %c0_i32 = arith.constant 0 : i32
    %c0_i32_0 = arith.constant 0 : i32
    %c0_i32_1 = arith.constant 0 : i32
    return %c0_i32, %c0_i32_0 : i32, i32
  }
  func.func @transform_6(%arg0: i32) -> (i32, i32) {
    %c0_i32 = arith.constant 0 : i32
    %c0_i32_0 = arith.constant 0 : i32
    %c0_i32_1 = arith.constant 0 : i32
    return %c0_i32, %c0_i32_0 : i32, i32
  }
  func.func @transform_7(%arg0: i32) -> (i32, i32) {
    %c0_i32 = arith.constant 0 : i32
    %c0_i32_0 = arith.constant 0 : i32
    %c0_i32_1 = arith.constant 0 : i32
    return %c0_i32, %c0_i32_0 : i32, i32
  }
  func.func @transform_8(%arg0: i32) -> (i32, i32) {
    %c0_i32 = arith.constant 0 : i32
    %c0_i32_0 = arith.constant 0 : i32
    %c0_i32_1 = arith.constant 0 : i32
    return %c0_i32, %c0_i32_0 : i32, i32
  }
  func.func @transform_9(%arg0: i32) -> (i32, i32) {
    %c0_i32 = arith.constant 0 : i32
    %c0_i32_0 = arith.constant 0 : i32
    %c0_i32_1 = arith.constant 0 : i32
    return %c0_i32, %c0_i32_0 : i32, i32
  }
  func.func @transform_10(%arg0: i32) -> (i32, i32) {
    %c0_i32 = arith.constant 0 : i32
    %c0_i32_0 = arith.constant 0 : i32
    %c0_i32_1 = arith.constant 0 : i32
    return %c0_i32, %c0_i32_0 : i32, i32
  }
  func.func @transform_11(%arg0: i32) -> (i32, i32) {
    %c0_i32 = arith.constant 0 : i32
    %c0_i32_0 = arith.constant 0 : i32
    %c0_i32_1 = arith.constant 0 : i32
    return %c0_i32, %c0_i32_0 : i32, i32
  }
  func.func @transform_12(%arg0: i32) -> (i32, i32) {
    %c0_i32 = arith.constant 0 : i32
    %c0_i32_0 = arith.constant 0 : i32
    %c0_i32_1 = arith.constant 0 : i32
    return %c0_i32, %c0_i32_0 : i32, i32
  }
  func.func @transform_13(%arg0: i32) -> (i32, i32) {
    %c0_i32 = arith.constant 0 : i32
    %c0_i32_0 = arith.constant 0 : i32
    return %arg0, %c0_i32 : i32, i32
  }
  func.func @transform_14(%arg0: i32) -> (i32, i32) {
    %c0_i32 = arith.constant 0 : i32
    %c0_i32_0 = arith.constant 0 : i32
    return %arg0, %c0_i32 : i32, i32
  }
}

</mosaic_0001>

<llo_original>
// kernel: tpu_custom_call.1
$region0: #{tpu_custom_call.1}
  #allocation0 [shape = 'u32[]', space=smem, size = 0x4, offset = 0x4, fixed_abs, tag = 'smem constant byte address 0x4 - core index']
  #allocation1 [shape = 'u32[144,128]{1,0:T(1,128)}', space=vmem, size = 0x12000, scoped, tag = 'internal scratch']
  %s0 = inlined_call_operand.vmem [shape: f32[128,29], index: 0, kind: input, shape index: {}]
  %s1 = inlined_call_operand.vmem [shape: f32[128,3], index: 1, kind: input, shape index: {}]
  %s2 = inlined_call_operand.vmem [shape: f32[16,8], index: 2, kind: input, shape index: {}]
  %s3 = inlined_call_operand.vmem [shape: f32[16,3], index: 3, kind: input, shape index: {}]
  %s4 = inlined_call_operand.vmem [shape: f32[16,3], index: 4, kind: input, shape index: {}]
  %s5 = inlined_call_operand.vmem [shape: f32[29,64], index: 5, kind: input, shape index: {}]
  %s6 = inlined_call_operand.vmem [shape: f32[3,64], index: 6, kind: input, shape index: {}]
  %s7 = inlined_call_operand.vmem [shape: f32[64,64], index: 7, kind: input, shape index: {}]
  %s8 = inlined_call_operand.vmem [shape: f32[64,16], index: 8, kind: input, shape index: {}]
  %s9 = inlined_call_operand.vmem [shape: f32[18,64], index: 9, kind: input, shape index: {}]
  %s10 = inlined_call_operand.vmem [shape: f32[64,64], index: 10, kind: input, shape index: {}]
  %s11 = inlined_call_operand.vmem [shape: f32[64,64], index: 11, kind: input, shape index: {}]
  %s12 = inlined_call_operand.vmem [shape: f32[64,3], index: 12, kind: input, shape index: {}]
  %s13 = inlined_call_operand.hbm [shape: f32[16,128], index: 13, kind: output, shape index: {0}]
  %s14 = inlined_call_operand.vmem [shape: f32[16,8], index: 14, kind: output, shape index: {1}]
  %15 = xla_tuple %s13, %s14
  %s16 = sld [smem:[#allocation0]]
  $region93: #{tpu_custom_call.1} parent=0
    _
  %s18 = ssub.s32 1, %s16
  %s19 = scalar_select 0, %s18, %s16
  $region1: #{tpu_custom_call.1} parent=0
    #allocation2 [shape = 'u8[8192]{0}', space=vmem, size = 0x2000, scoped, tag = 'output window, operand 0']
    #allocation3 [shape = 's32[2]{0}', space=sflag, size = 0x8, scoped, tag = 'scoped memory for tpu_custom_call.1']
    %20 = vsyncpa [#allocation3], 0
    %s21 = scalar_lea.sflag [#allocation3], 1
    %22 = vsyncpa %s21, 0
    loop: start=0, step=1, limit=4
    $region2: #{tpu_custom_call.1} parent=1 // loop_pre_header
      _
    $region3: #{tpu_custom_call.1} parent=1 // loop_header
      %s24 = sphi 0, %s28
      %p25 = scmp.ge.s32.totalorder %s24, 4
      %s34 = sphi 0, %s36
      %s37 = sphi 0, %s34
      %s38 = sphi 0, %s37
      %s54 = sphi 0, %s38
      %s60 = sphi 0, %s62
      %s63 = sphi 0, %s60
      %s64 = sphi 0, %s63
      %s80 = sphi 0, %s64
      %s86 = sphi 0, %s88
      %s89 = sphi 0, %s86
      %s90 = sphi 0, %s89
      %s106 = sphi 0, %s90
      %s112 = sphi 0, %s114
      %s115 = sphi 0, %s112
      %s116 = sphi 0, %s115
      %s132 = sphi 0, %s116
      %s138 = sphi 0, %s140
      %s141 = sphi 0, %s138
      %s142 = sphi 0, %s141
      %s158 = sphi 0, %s142
      %s162 = sphi 0, %s162
      %s164 = sphi 0, %s162
      %s165 = sphi 0, %s164
      %s179 = sphi 0, %s165
      %s183 = sphi 0, %s183
      %s185 = sphi 0, %s183
      %s186 = sphi 0, %s185
      %s200 = sphi 0, %s186
      %s204 = sphi 0, %s204
      %s206 = sphi 0, %s204
      %s207 = sphi 0, %s206
      %s221 = sphi 0, %s207
      %s225 = sphi 0, %s225
      %s227 = sphi 0, %s225
      %s228 = sphi 0, %s227
      %s242 = sphi 0, %s228
      %s246 = sphi 0, %s246
      %s248 = sphi 0, %s246
      %s249 = sphi 0, %s248
      %s263 = sphi 0, %s249
      %s267 = sphi 0, %s267
      %s269 = sphi 0, %s267
      %s270 = sphi 0, %s269
      %s284 = sphi 0, %s270
      %s288 = sphi 0, %s288
      %s290 = sphi 0, %s288
      %s291 = sphi 0, %s290
      %s305 = sphi 0, %s291
      %s309 = sphi 0, %s309
      %s311 = sphi 0, %s309
      %s312 = sphi 0, %s311
      %s326 = sphi 0, %s312
      %s332 = sphi 0, %s334
      %s335 = sphi 0, %s332
      %s336 = sphi 0, %s335
      %s352 = sphi 0, %s336
      %s358 = sphi 0, %s360
      %s361 = sphi 0, %s358
      %s362 = sphi 0, %s361
      %s378 = sphi 0, %s362
    $region4: #{tpu_custom_call.1} parent=1 // loop_header_branch
      %27 = sbr.rel (%p25) target = $region8
    $region5: #{tpu_custom_call.1} parent=1 // loop_body
      %s29 = ssub.s32 %s24, 1
      %s30 = ssub.s32 %s24, 2
      %s31 = sadd.s32 %s24, 1
      %s32 = ssub.s32 %s24, %s31
      %p33 = scmp.eq.s32.totalorder %s32, 0
      %s35 = sadd.s32 %s34, 1
      %s36 = scalar_select %p33, %s34, %s35
      %p39 = pneg %p33
      %p40 = scmp.eq.s32.totalorder %s24, 1
      %p41 = por %p39, %p40
      %p42 = scmp.ne.s32.totalorder %s34, %s37
      %p43 = scmp.eq.s32.totalorder %s24, 0
      %p44 = por %p42, %p43
      %p45 = scmp.ne.s32.totalorder %s34, %s37
      %p46 = scmp.eq.s32.totalorder %s29, 1
      %p47 = por %p45, %p46
      %p48 = scmp.ne.s32.totalorder %s37, %s38
      %p49 = scmp.eq.s32.totalorder %s29, 0
      %p50 = por %p48, %p49
      %p51 = scmp.ne.s32.totalorder %s37, %s38
      %p52 = scmp.eq.s32.totalorder %s30, 1
      %p53 = por %p51, %p52
      %p55 = scmp.ne.s32.totalorder %s38, %s54
      %p56 = scmp.eq.s32.totalorder %s30, 0
      %p57 = por %p55, %p56
      %s58 = ssub.s32 %s24, %s31
      %p59 = scmp.eq.s32.totalorder %s58, 0
      %s61 = sadd.s32 %s60, 1
      %s62 = scalar_select %p59, %s60, %s61
      %p65 = pneg %p59
      %p66 = scmp.eq.s32.totalorder %s24, 1
      %p67 = por %p65, %p66
      %p68 = scmp.ne.s32.totalorder %s60, %s63
      %p69 = scmp.eq.s32.totalorder %s24, 0
      %p70 = por %p68, %p69
      %p71 = scmp.ne.s32.totalorder %s60, %s63
      %p72 = scmp.eq.s32.totalorder %s29, 1
      %p73 = por %p71, %p72
      %p74 = scmp.ne.s32.totalorder %s63, %s64
      %p75 = scmp.eq.s32.totalorder %s29, 0
      %p76 = por %p74, %p75
      %p77 = scmp.ne.s32.totalorder %s63, %s64
      %p78 = scmp.eq.s32.totalorder %s30, 1
      %p79 = por %p77, %p78
      %p81 = scmp.ne.s32.totalorder %s64, %s80
      %p82 = scmp.eq.s32.totalorder %s30, 0
      %p83 = por %p81, %p82
      %s84 = ssub.s32 %s24, %s31
      %p85 = scmp.eq.s32.totalorder %s84, 0
      %s87 = sadd.s32 %s86, 1
      %s88 = scalar_select %p85, %s86, %s87
      %p91 = pneg %p85
      %p92 = scmp.eq.s32.totalorder %s24, 1
      %p93 = por %p91, %p92
      %p94 = scmp.ne.s32.totalorder %s86, %s89
      %p95 = scmp.eq.s32.totalorder %s24, 0
      %p96 = por %p94, %p95
      %p97 = scmp.ne.s32.totalorder %s86, %s89
      %p98 = scmp.eq.s32.totalorder %s29, 1
      %p99 = por %p97, %p98
      %p100 = scmp.ne.s32.totalorder %s89, %s90
      %p101 = scmp.eq.s32.totalorder %s29, 0
      %p102 = por %p100, %p101
      %p103 = scmp.ne.s32.totalorder %s89, %s90
      %p104 = scmp.eq.s32.totalorder %s30, 1
      %p105 = por %p103, %p104
      %p107 = scmp.ne.s32.totalorder %s90, %s106
      %p108 = scmp.eq.s32.totalorder %s30, 0
      %p109 = por %p107, %p108
      %s110 = ssub.s32 %s24, %s31
      %p111 = scmp.eq.s32.totalorder %s110, 0
      %s113 = sadd.s32 %s112, 1
      %s114 = scalar_select %p111, %s112, %s113
      %p117 = pneg %p111
      %p118 = scmp.eq.s32.totalorder %s24, 1
      %p119 = por %p117, %p118
      %p120 = scmp.ne.s32.totalorder %s112, %s115
      %p121 = scmp.eq.s32.totalorder %s24, 0
      %p122 = por %p120, %p121
      %p123 = scmp.ne.s32.totalorder %s112, %s115
      %p124 = scmp.eq.s32.totalorder %s29, 1
      %p125 = por %p123, %p124
      %p126 = scmp.ne.s32.totalorder %s115, %s116
      %p127 = scmp.eq.s32.totalorder %s29, 0
      %p128 = por %p126, %p127
      %p129 = scmp.ne.s32.totalorder %s115, %s116
      %p130 = scmp.eq.s32.totalorder %s30, 1
      %p131 = por %p129, %p130
      %p133 = scmp.ne.s32.totalorder %s116, %s132
      %p134 = scmp.eq.s32.totalorder %s30, 0
      %p135 = por %p133, %p134
      %s136 = ssub.s32 %s24, %s31
      %p137 = scmp.eq.s32.totalorder %s136, 0
      %s139 = sadd.s32 %s138, 1
      %s140 = scalar_select %p137, %s138, %s139
      %p143 = pneg %p137
      %p144 = scmp.eq.s32.totalorder %s24, 1
      %p145 = por %p143, %p144
      %p146 = scmp.ne.s32.totalorder %s138, %s141
      %p147 = scmp.eq.s32.totalorder %s24, 0
      %p148 = por %p146, %p147
      %p149 = scmp.ne.s32.totalorder %s138, %s141
      %p150 = scmp.eq.s32.totalorder %s29, 1
      %p151 = por %p149, %p150
      %p152 = scmp.ne.s32.totalorder %s141, %s142
      %p153 = scmp.eq.s32.totalorder %s29, 0
      %p154 = por %p152, %p153
      %p155 = scmp.ne.s32.totalorder %s141, %s142
      %p156 = scmp.eq.s32.totalorder %s30, 1
      %p157 = por %p155, %p156
      %p159 = scmp.ne.s32.totalorder %s142, %s158
      %p160 = scmp.eq.s32.totalorder %s30, 0
      %p161 = por %p159, %p160
      %s163 = sadd.s32 %s162, 1
      %p166 = scmp.eq.s32.totalorder %s24, 1
      %p167 = scmp.ne.s32.totalorder %s162, %s164
      %p168 = scmp.eq.s32.totalorder %s24, 0
      %p169 = por %p167, %p168
      %p170 = scmp.ne.s32.totalorder %s162, %s164
      %p171 = scmp.eq.s32.totalorder %s29, 1
      %p172 = por %p170, %p171
      %p173 = scmp.ne.s32.totalorder %s164, %s165
      %p174 = scmp.eq.s32.totalorder %s29, 0
      %p175 = por %p173, %p174
      %p176 = scmp.ne.s32.totalorder %s164, %s165
      %p177 = scmp.eq.s32.totalorder %s30, 1
      %p178 = por %p176, %p177
      %p180 = scmp.ne.s32.totalorder %s165, %s179
      %p181 = scmp.eq.s32.totalorder %s30, 0
      %p182 = por %p180, %p181
      %s184 = sadd.s32 %s183, 1
      %p187 = scmp.eq.s32.totalorder %s24, 1
      %p188 = scmp.ne.s32.totalorder %s183, %s185
      %p189 = scmp.eq.s32.totalorder %s24, 0
      %p190 = por %p188, %p189
      %p191 = scmp.ne.s32.totalorder %s183, %s185
      %p192 = scmp.eq.s32.totalorder %s29, 1
      %p193 = por %p191, %p192
      %p194 = scmp.ne.s32.totalorder %s185, %s186
      %p195 = scmp.eq.s32.totalorder %s29, 0
      %p196 = por %p194, %p195
      %p197 = scmp.ne.s32.totalorder %s185, %s186
      %p198 = scmp.eq.s32.totalorder %s30, 1
      %p199 = por %p197, %p198
      %p201 = scmp.ne.s32.totalorder %s186, %s200
      %p202 = scmp.eq.s32.totalorder %s30, 0
      %p203 = por %p201, %p202
      %s205 = sadd.s32 %s204, 1
      %p208 = scmp.eq.s32.totalorder %s24, 1
      %p209 = scmp.ne.s32.totalorder %s204, %s206
      %p210 = scmp.eq.s32.totalorder %s24, 0
      %p211 = por %p209, %p210
      %p212 = scmp.ne.s32.totalorder %s204, %s206
      %p213 = scmp.eq.s32.totalorder %s29, 1
      %p214 = por %p212, %p213
      %p215 = scmp.ne.s32.totalorder %s206, %s207
      %p216 = scmp.eq.s32.totalorder %s29, 0
      %p217 = por %p215, %p216
      %p218 = scmp.ne.s32.totalorder %s206, %s207
      %p219 = scmp.eq.s32.totalorder %s30, 1
      %p220 = por %p218, %p219
      %p222 = scmp.ne.s32.totalorder %s207, %s221
      %p223 = scmp.eq.s32.totalorder %s30, 0
      %p224 = por %p222, %p223
      %s226 = sadd.s32 %s225, 1
      %p229 = scmp.eq.s32.totalorder %s24, 1
      %p230 = scmp.ne.s32.totalorder %s225, %s227
      %p231 = scmp.eq.s32.totalorder %s24, 0
      %p232 = por %p230, %p231
      %p233 = scmp.ne.s32.totalorder %s225, %s227
      %p234 = scmp.eq.s32.totalorder %s29, 1
      %p235 = por %p233, %p234
      %p236 = scmp.ne.s32.totalorder %s227, %s228
      %p237 = scmp.eq.s32.totalorder %s29, 0
      %p238 = por %p236, %p237
      %p239 = scmp.ne.s32.totalorder %s227, %s228
      %p240 = scmp.eq.s32.totalorder %s30, 1
      %p241 = por %p239, %p240
      %p243 = scmp.ne.s32.totalorder %s228, %s242
      %p244 = scmp.eq.s32.totalorder %s30, 0
      %p245 = por %p243, %p244
      %s247 = sadd.s32 %s246, 1
      %p250 = scmp.eq.s32.totalorder %s24, 1
      %p251 = scmp.ne.s32.totalorder %s246, %s248
      %p252 = scmp.eq.s32.totalorder %s24, 0
      %p253 = por %p251, %p252
      %p254 = scmp.ne.s32.totalorder %s246, %s248
      %p255 = scmp.eq.s32.totalorder %s29, 1
      %p256 = por %p254, %p255
      %p257 = scmp.ne.s32.totalorder %s248, %s249
      %p258 = scmp.eq.s32.totalorder %s29, 0
      %p259 = por %p257, %p258
      %p260 = scmp.ne.s32.totalorder %s248, %s249
      %p261 = scmp.eq.s32.totalorder %s30, 1
      %p262 = por %p260, %p261
      %p264 = scmp.ne.s32.totalorder %s249, %s263
      %p265 = scmp.eq.s32.totalorder %s30, 0
      %p266 = por %p264, %p265
      %s268 = sadd.s32 %s267, 1
      %p271 = scmp.eq.s32.totalorder %s24, 1
      %p272 = scmp.ne.s32.totalorder %s267, %s269
      %p273 = scmp.eq.s32.totalorder %s24, 0
      %p274 = por %p272, %p273
      %p275 = scmp.ne.s32.totalorder %s267, %s269
      %p276 = scmp.eq.s32.totalorder %s29, 1
      %p277 = por %p275, %p276
      %p278 = scmp.ne.s32.totalorder %s269, %s270
      %p279 = scmp.eq.s32.totalorder %s29, 0
      %p280 = por %p278, %p279
      %p281 = scmp.ne.s32.totalorder %s269, %s270
      %p282 = scmp.eq.s32.totalorder %s30, 1
      %p283 = por %p281, %p282
      %p285 = scmp.ne.s32.totalorder %s270, %s284
      %p286 = scmp.eq.s32.totalorder %s30, 0
      %p287 = por %p285, %p286
      %s289 = sadd.s32 %s288, 1
      %p292 = scmp.eq.s32.totalorder %s24, 1
      %p293 = scmp.ne.s32.totalorder %s288, %s290
      %p294 = scmp.eq.s32.totalorder %s24, 0
      %p295 = por %p293, %p294
      %p296 = scmp.ne.s32.totalorder %s288, %s290
      %p297 = scmp.eq.s32.totalorder %s29, 1
      %p298 = por %p296, %p297
      %p299 = scmp.ne.s32.totalorder %s290, %s291
      %p300 = scmp.eq.s32.totalorder %s29, 0
      %p301 = por %p299, %p300
      %p302 = scmp.ne.s32.totalorder %s290, %s291
      %p303 = scmp.eq.s32.totalorder %s30, 1
      %p304 = por %p302, %p303
      %p306 = scmp.ne.s32.totalorder %s291, %s305
      %p307 = scmp.eq.s32.totalorder %s30, 0
      %p308 = por %p306, %p307
      %s310 = sadd.s32 %s309, 1
      %p313 = scmp.eq.s32.totalorder %s24, 1
      %p314 = scmp.ne.s32.totalorder %s309, %s311
      %p315 = scmp.eq.s32.totalorder %s24, 0
      %p316 = por %p314, %p315
      %p317 = scmp.ne.s32.totalorder %s309, %s311
      %p318 = scmp.eq.s32.totalorder %s29, 1
      %p319 = por %p317, %p318
      %p320 = scmp.ne.s32.totalorder %s311, %s312
      %p321 = scmp.eq.s32.totalorder %s29, 0
      %p322 = por %p320, %p321
      %p323 = scmp.ne.s32.totalorder %s311, %s312
      %p324 = scmp.eq.s32.totalorder %s30, 1
      %p325 = por %p323, %p324
      %p327 = scmp.ne.s32.totalorder %s312, %s326
      %p328 = scmp.eq.s32.totalorder %s30, 0
      %p329 = por %p327, %p328
      %s330 = ssub.s32 %s24, %s31
      %p331 = scmp.eq.s32.totalorder %s330, 0
      %s333 = sadd.s32 %s332, 1
      %s334 = scalar_select %p331, %s332, %s333
      %p337 = pneg %p331
      %p338 = scmp.eq.s32.totalorder %s24, 1
      %p339 = por %p337, %p338
      %p340 = scmp.ne.s32.totalorder %s332, %s335
      %p341 = scmp.eq.s32.totalorder %s24, 0
      %p342 = por %p340, %p341
      %p343 = scmp.ne.s32.totalorder %s332, %s335
      %p344 = scmp.eq.s32.totalorder %s29, 1
      %p345 = por %p343, %p344
      %p346 = scmp.ne.s32.totalorder %s335, %s336
      %p347 = scmp.eq.s32.totalorder %s29, 0
      %p348 = por %p346, %p347
      %p349 = scmp.ne.s32.totalorder %s335, %s336
      %p350 = scmp.eq.s32.totalorder %s30, 1
      %p351 = por %p349, %p350
      %p353 = scmp.ne.s32.totalorder %s336, %s352
      %p354 = scmp.eq.s32.totalorder %s30, 0
      %p355 = por %p353, %p354
      %s356 = ssub.s32 %s24, %s31
      %p357 = scmp.eq.s32.totalorder %s356, 0
      %s359 = sadd.s32 %s358, 1
      %s360 = scalar_select %p357, %s358, %s359
      %p363 = pneg %p357
      %p364 = scmp.eq.s32.totalorder %s24, 1
      %p365 = por %p363, %p364
      %p366 = scmp.ne.s32.totalorder %s358, %s361
      %p367 = scmp.eq.s32.totalorder %s24, 0
      %p368 = por %p366, %p367
      %p369 = scmp.ne.s32.totalorder %s358, %s361
      %p370 = scmp.eq.s32.totalorder %s29, 1
      %p371 = por %p369, %p370
      %p372 = scmp.ne.s32.totalorder %s361, %s362
      %p373 = scmp.eq.s32.totalorder %s29, 0
      %p374 = por %p372, %p373
      %p375 = scmp.ne.s32.totalorder %s361, %s362
      %p376 = scmp.eq.s32.totalorder %s30, 1
      %p377 = por %p375, %p376
      %p379 = scmp.ne.s32.totalorder %s362, %s378
      %p380 = scmp.eq.s32.totalorder %s30, 0
      %p381 = por %p379, %p380
      %p382 = scmp.le.s32.totalorder 1, %s24
      %p383 = scmp.lt.s32.totalorder %s24, 3
      %p384 = pnand %p382, %p383
      %p385 = pneg %p384
      // Predicated region
      $region9: #{tpu_custom_call.1} parent=5 // pred_check
        _
      $region10: #{tpu_custom_call.1} parent=5 // pred_check_branch
        %387 = sbr.rel (%p384) target = $region12
      $region11: #{tpu_custom_call.1} parent=5 // pred_region
        %s388 = ssub.s32 %s24, 1
        // Predicated region
        $region13: #{tpu_custom_call.1} parent=11 // pred_check
          %p389 = pneg %p175
        $region14: #{tpu_custom_call.1} parent=11 // pred_check_branch
          %391 = sbr.rel (%p389) target = $region16
        $region15: #{tpu_custom_call.1} parent=11 // pred_region
          _
        $region16: #{tpu_custom_call.1} parent=11 // pred_fallthru
          _
        // Predicated region
        $region17: #{tpu_custom_call.1} parent=11 // pred_check
          %p392 = pneg %p196
        $region18: #{tpu_custom_call.1} parent=11 // pred_check_branch
          %394 = sbr.rel (%p392) target = $region20
        $region19: #{tpu_custom_call.1} parent=11 // pred_region
          _
        $region20: #{tpu_custom_call.1} parent=11 // pred_fallthru
          _
        // Predicated region
        $region21: #{tpu_custom_call.1} parent=11 // pred_check
          %p395 = pneg %p217
        $region22: #{tpu_custom_call.1} parent=11 // pred_check_branch
          %397 = sbr.rel (%p395) target = $region24
        $region23: #{tpu_custom_call.1} parent=11 // pred_region
          _
        $region24: #{tpu_custom_call.1} parent=11 // pred_fallthru
          _
        // Predicated region
        $region25: #{tpu_custom_call.1} parent=11 // pred_check
          %p398 = pneg %p238
        $region26: #{tpu_custom_call.1} parent=11 // pred_check_branch
          %400 = sbr.rel (%p398) target = $region28
        $region27: #{tpu_custom_call.1} parent=11 // pred_region
          _
        $region28: #{tpu_custom_call.1} parent=11 // pred_fallthru
          _
        // Predicated region
        $region29: #{tpu_custom_call.1} parent=11 // pred_check
          %p401 = pneg %p259
        $region30: #{tpu_custom_call.1} parent=11 // pred_check_branch
          %403 = sbr.rel (%p401) target = $region32
        $region31: #{tpu_custom_call.1} parent=11 // pred_region
          _
        $region32: #{tpu_custom_call.1} parent=11 // pred_fallthru
          _
        // Predicated region
        $region33: #{tpu_custom_call.1} parent=11 // pred_check
          %p404 = pneg %p280
        $region34: #{tpu_custom_call.1} parent=11 // pred_check_branch
          %406 = sbr.rel (%p404) target = $region36
        $region35: #{tpu_custom_call.1} parent=11 // pred_region
          _
        $region36: #{tpu_custom_call.1} parent=11 // pred_fallthru
          _
        // Predicated region
        $region37: #{tpu_custom_call.1} parent=11 // pred_check
          %p407 = pneg %p301
        $region38: #{tpu_custom_call.1} parent=11 // pred_check_branch
          %409 = sbr.rel (%p407) target = $region40
        $region39: #{tpu_custom_call.1} parent=11 // pred_region
          _
        $region40: #{tpu_custom_call.1} parent=11 // pred_fallthru
          _
        // Predicated region
        $region41: #{tpu_custom_call.1} parent=11 // pred_check
          %p410 = pneg %p322
        $region42: #{tpu_custom_call.1} parent=11 // pred_check_branch
          %412 = sbr.rel (%p410) target = $region44
        $region43: #{tpu_custom_call.1} parent=11 // pred_region
          _
        $region44: #{tpu_custom_call.1} parent=11 // pred_fallthru
          _
      $region12: #{tpu_custom_call.1} parent=5 // pred_fallthru
        _
      %p413 = scmp.lt.s32.totalorder %s24, 2
      // Predicated region
      $region45: #{tpu_custom_call.1} parent=5 // pred_check
        %p414 = pneg %p413
      $region46: #{tpu_custom_call.1} parent=5 // pred_check_branch
        %416 = sbr.rel (%p414) target = $region48
      $region47: #{tpu_custom_call.1} parent=5 // pred_region
        // Predicated region
        $region49: #{tpu_custom_call.1} parent=47 // pred_check
          %p417 = pneg %p44
        $region50: #{tpu_custom_call.1} parent=47 // pred_check_branch
          %419 = sbr.rel (%p417) target = $region52
        $region51: #{tpu_custom_call.1} parent=47 // pred_region
          %s420 = smul.u32 8, %s24
          %p421 = scmp.lt.s32.totalorder %s420, 15
          %s422 = scalar_select %p421, %s420, 15
          %s423 = smul.addr %s422, 8
          %s424 = scalar_lea.vmem %s0, %s423
          %s425 = smul.u32 8, %s24
        $region52: #{tpu_custom_call.1} parent=47 // pred_fallthru
          _
        // Predicated region
        $region53: #{tpu_custom_call.1} parent=47 // pred_check
          %p426 = pneg %p70
        $region54: #{tpu_custom_call.1} parent=47 // pred_check_branch
          %428 = sbr.rel (%p426) target = $region56
        $region55: #{tpu_custom_call.1} parent=47 // pred_region
          %s429 = smul.u32 8, %s24
          %p430 = scmp.lt.s32.totalorder %s429, 15
          %s431 = scalar_select %p430, %s429, 15
          %s432 = smul.addr %s431, 8
          %s433 = scalar_lea.vmem %s1, %s432
          %s434 = smul.u32 8, %s24
        $region56: #{tpu_custom_call.1} parent=47 // pred_fallthru
          _
        // Predicated region
        $region57: #{tpu_custom_call.1} parent=47 // pred_check
          %p435 = pneg %p96
        $region58: #{tpu_custom_call.1} parent=47 // pred_check_branch
          %437 = sbr.rel (%p435) target = $region60
        $region59: #{tpu_custom_call.1} parent=47 // pred_region
          %p438 = scmp.lt.s32.totalorder %s24, 1
          %s439 = scalar_select %p438, %s24, 1
          %s440 = smul.addr %s439, 8
          %s441 = scalar_lea.vmem %s2, %s440
        $region60: #{tpu_custom_call.1} parent=47 // pred_fallthru
          _
        // Predicated region
        $region61: #{tpu_custom_call.1} parent=47 // pred_check
          %p442 = pneg %p122
        $region62: #{tpu_custom_call.1} parent=47 // pred_check_branch
          %444 = sbr.rel (%p442) target = $region64
        $region63: #{tpu_custom_call.1} parent=47 // pred_region
          %p445 = scmp.lt.s32.totalorder %s24, 1
          %s446 = scalar_select %p445, %s24, 1
          %s447 = smul.addr %s446, 8
          %s448 = scalar_lea.vmem %s3, %s447
        $region64: #{tpu_custom_call.1} parent=47 // pred_fallthru
          _
        // Predicated region
        $region65: #{tpu_custom_call.1} parent=47 // pred_check
          %p449 = pneg %p148
        $region66: #{tpu_custom_call.1} parent=47 // pred_check_branch
          %451 = sbr.rel (%p449) target = $region68
        $region67: #{tpu_custom_call.1} parent=47 // pred_region
          %p452 = scmp.lt.s32.totalorder %s24, 1
          %s453 = scalar_select %p452, %s24, 1
          %s454 = smul.addr %s453, 8
          %s455 = scalar_lea.vmem %s4, %s454
        $region68: #{tpu_custom_call.1} parent=47 // pred_fallthru
          _
      $region48: #{tpu_custom_call.1} parent=5 // pred_fallthru
        _
      %p456 = scmp.le.s32.totalorder 1, %s24
      %p457 = scmp.lt.s32.totalorder %s24, 3
      %p458 = pnand %p456, %p457
      %p459 = pneg %p458
      // Predicated region
      $region69: #{tpu_custom_call.1} parent=5 // pred_check
        _
      $region70: #{tpu_custom_call.1} parent=5 // pred_check_branch
        %461 = sbr.rel (%p458) target = $region72
      $region71: #{tpu_custom_call.1} parent=5 // pred_region
        %s462 = ssub.s32 %s24, 1
        %s463 = smul.u32 8, %s29
        %p464 = scmp.lt.s32.totalorder %s463, 15
        %s465 = scalar_select %p464, %s463, 15
        %s466 = smul.addr %s465, 8
        %s467 = scalar_lea.vmem %s0, %s466
        %p468 = pneg %p50
        %p469 = pneg %p47
        %s470 = smul.u32 8, %s29
        %p471 = scmp.lt.s32.totalorder %s470, 15
        %s472 = scalar_select %p471, %s470, 15
        %s473 = smul.addr %s472, 8
        %s474 = scalar_lea.vmem %s1, %s473
        %p475 = pneg %p76
        %p476 = pneg %p73
        %p477 = scmp.lt.s32.totalorder %s29, 1
        %s478 = scalar_select %p477, %s29, 1
        %s479 = smul.addr %s478, 8
        %s480 = scalar_lea.vmem %s2, %s479
        %p481 = pneg %p102
        %p482 = pneg %p99
        %p483 = scmp.lt.s32.totalorder %s29, 1
        %s484 = scalar_select %p483, %s29, 1
        %s485 = smul.addr %s484, 8
        %s486 = scalar_lea.vmem %s3, %s485
        %p487 = pneg %p128
        %p488 = pneg %p125
        %p489 = scmp.lt.s32.totalorder %s29, 1
        %s490 = scalar_select %p489, %s29, 1
        %s491 = smul.addr %s490, 8
        %s492 = scalar_lea.vmem %s4, %s491
        %p493 = pneg %p154
        %p494 = pneg %p151
        %p495 = pneg %p175
        %p496 = pneg %p172
        %p497 = pneg %p196
        %p498 = pneg %p193
        %p499 = pneg %p217
        %p500 = pneg %p214
        %p501 = pneg %p238
        %p502 = pneg %p235
        %p503 = pneg %p259
        %p504 = pneg %p256
        %p505 = pneg %p280
        %p506 = pneg %p277
        %p507 = pneg %p301
        %p508 = pneg %p298
        %p509 = pneg %p322
        %p510 = pneg %p319
        %p511 = pneg %p348
        %p512 = pneg %p345
        %s513 = sand.u32 %s335, 1
        %s514 = scalar_lea.sflag [#allocation3], %s513
        %s515 = sand.u32 %s335, 1
        %s516 = smul.addr %s515, 8
        %s517 = scalar_lea.vmem [#allocation2], %s516
        %p518 = pneg %p374
        %p519 = pneg %p371
        %p520 = scmp.lt.s32.totalorder %s29, 1
        %s521 = scalar_select %p520, %s29, 1
        %s522 = smul.addr %s521, 8
        %s523 = scalar_lea.vmem %s14, %s522
        %s524 = smul.u32 8, %s29
        %p525 = scmp.lt.s32.totalorder %s524, 15
        %s526 = scalar_select %p525, %s524, 15
        %s527 = smul.addr %s526, 8
        %s528 = scalar_lea.vmem %s0, %s527
        %s529 = smul.u32 8, %s29
        %s530 = smul.u32 8, %s29
        %p531 = scmp.lt.s32.totalorder %s530, 15
        %s532 = scalar_select %p531, %s530, 15
        %s533 = smul.addr %s532, 8
        %s534 = scalar_lea.vmem %s1, %s533
        %s535 = smul.u32 8, %s29
        %p536 = scmp.lt.s32.totalorder %s29, 1
        %s537 = scalar_select %p536, %s29, 1
        %s538 = smul.addr %s537, 8
        %s539 = scalar_lea.vmem %s2, %s538
        %p540 = scmp.lt.s32.totalorder %s29, 1
        %s541 = scalar_select %p540, %s29, 1
        %s542 = smul.addr %s541, 8
        %s543 = scalar_lea.vmem %s3, %s542
        %p544 = scmp.lt.s32.totalorder %s29, 1
        %s545 = scalar_select %p544, %s29, 1
        %s546 = smul.addr %s545, 8
        %s547 = scalar_lea.vmem %s4, %s546
        %p548 = scmp.lt.s32.totalorder %s29, 1
        %s549 = scalar_select %p548, %s29, 1
        %s550 = smul.addr %s549, 8
        %s551 = scalar_lea.vmem %s14, %s550
        %v552 = vld [vmem:[%s528] sm:$0xff]
        %v553 = vld [vmem:[%s528 + $0x8] sm:$0xff]
        %v554 = vld [vmem:[%s528 + $0x10] sm:$0xff]
        %v555 = vld [vmem:[%s528 + $0x18] sm:$0xff]
        %v556 = vld [vmem:[%s528 + $0x20] sm:$0xff]
        %v557 = vld [vmem:[%s528 + $0x28] sm:$0xff]
        %v558 = vld [vmem:[%s528 + $0x30] sm:$0xff]
        %v559 = vld [vmem:[%s528 + $0x38] sm:$0xff]
        %v560 = vld [vmem:[%s5] sm:$0xff]
        %v561 = vld [vmem:[%s5 + $0x8] sm:$0xff]
        %v562 = vld [vmem:[%s5 + $0x10] sm:$0xff]
        %v563 = vld [vmem:[%s5 + $0x18] sm:$0x1f]
        %v564 = vld [vmem:[%s534] sm:$0xff]
        %v565 = vld [vmem:[%s534 + $0x8] sm:$0xff]
        %v566 = vld [vmem:[%s534 + $0x10] sm:$0xff]
        %v567 = vld [vmem:[%s534 + $0x18] sm:$0xff]
        %v568 = vld [vmem:[%s534 + $0x20] sm:$0xff]
        %v569 = vld [vmem:[%s534 + $0x28] sm:$0xff]
        %v570 = vld [vmem:[%s534 + $0x30] sm:$0xff]
        %v571 = vld [vmem:[%s534 + $0x38] sm:$0xff]
        %v572 = vld [vmem:[%s6] sm:$0x7]
        %vm573 = vcmask 23552
        %v575 = vsel %vm573, %v564, 0
        %v578 = vsel %vm573, %v565, 0
        %v581 = vsel %vm573, %v566, 0
        %v584 = vsel %vm573, %v567, 0
        %v587 = vsel %vm573, %v568, 0
        %v590 = vsel %vm573, %v569, 0
        %v593 = vsel %vm573, %v570, 0
        %v596 = vsel %vm573, %v571, 0
        %vm598 = vcmask 1042432
        %v600 = vsel %vm598, %v572, 0
        %602 = vmatprep.subr.mxu0 0.0
        %603 = vmatpush1.msra.mxu0 %v600
        %604 = vmatprep.subr.mxu0 0.0
        %605 = vmatpush1.msra.mxu0 0.0
        %606 = vmatprep.subr.mxu0 0.0
        %607 = vmatpush1.msra.mxu0 0.0
        %608 = vmatprep.subr.mxu0 0.0
        %609 = vmatpush1.msra.mxu0 0.0
        %610 = vmatprep.subr.mxu0 0.0
        %611 = vmatpush1.msra.mxu0 0.0
        %612 = vmatprep.subr.mxu0 0.0
        %613 = vmatpush1.msra.mxu0 0.0
        %614 = vmatprep.subr.mxu0 0.0
        %615 = vmatpush1.msra.mxu0 0.0
        %616 = vmatprep.subr.mxu0 0.0
        %617 = vmatpush1.msra.mxu0 0.0
        %618 = vmatprep.subr.mxu0 0.0
        %619 = vmatpush1.msra.mxu0 0.0
        %620 = vmatprep.subr.mxu0 0.0
        %621 = vmatpush1.msra.mxu0 0.0
        %622 = vmatprep.subr.mxu0 0.0
        %623 = vmatpush1.msra.mxu0 0.0
        %624 = vmatprep.subr.mxu0 0.0
        %625 = vmatpush1.msra.mxu0 0.0
        %626 = vmatprep.subr.mxu0 0.0
        %627 = vmatpush1.msra.mxu0 0.0
        %628 = vmatprep.subr.mxu0 0.0
        %629 = vmatpush1.msra.mxu0 0.0
        %630 = vmatprep.subr.mxu0 0.0
        %631 = vmatpush1.msra.mxu0 0.0
        %632 = vmatprep.subr.mxu0 0.0
        %633 = vmatpush1.msra.mxu0 0.0
        %634 = vmatprep.subr.mxu0 0.0
        %635 = vmatpush1.msra.mxu0 0.0
        %636 = vmatprep.subr.mxu0 0.0
        %637 = vmatpush1.msra.mxu0 0.0
        %638 = vmatprep.subr.mxu0 0.0
        %639 = vmatpush1.msra.mxu0 0.0
        %640 = vmatprep.subr.mxu0 0.0
        %641 = vmatpush1.msra.mxu0 0.0
        %642 = vmatprep.subr.mxu0 0.0
        %643 = vmatpush1.msra.mxu0 0.0
        %644 = vmatprep.subr.mxu0 0.0
        %645 = vmatpush1.msra.mxu0 0.0
        %646 = vmatprep.subr.mxu0 0.0
        %647 = vmatpush1.msra.mxu0 0.0
        %648 = vmatprep.subr.mxu0 0.0
        %649 = vmatpush1.msra.mxu0 0.0
        %650 = vmatprep.subr.mxu0 0.0
        %651 = vmatpush1.msra.mxu0 0.0
        %652 = vmatprep.subr.mxu0 0.0
        %653 = vmatpush1.msra.mxu0 0.0
        %654 = vmatprep.subr.mxu0 0.0
        %655 = vmatpush1.msra.mxu0 0.0
        %656 = vmatprep.subr.mxu0 0.0
        %657 = vmatpush1.msra.mxu0 0.0
        %658 = vmatprep.subr.mxu0 0.0
        %659 = vmatpush1.msra.mxu0 0.0
        %660 = vmatprep.subr.mxu0 0.0
        %661 = vmatpush1.msra.mxu0 0.0
        %662 = vmatprep.subr.mxu0 0.0
        %663 = vmatpush1.msra.mxu0 0.0
        %664 = vmatprep.subr.mxu0 0.0
        %665 = vmatpush1.msra.mxu0 0.0
        %666 = vmatprep.mubr.f32.mxu0 0.0
        %667 = vmatmul.mubr.f32.gmra.mrb[0].mxu0 %v575
        %v668 = vpop.f32.mrb[0].mxu0
        %v669 = vadd.f32 0.0, %v668
        %v670 = vpop.f32.mrb[0].mxu0
        %671 = vmatprep.mubr.f32.mxu0 0.0
        %672 = vmatmul.mubr.f32.gmra.mrb[0].mxu0 %v578
        %v673 = vpop.f32.mrb[0].mxu0
        %v674 = vadd.f32 0.0, %v673
        %v675 = vpop.f32.mrb[0].mxu0
        %676 = vmatprep.mubr.f32.mxu0 0.0
        %677 = vmatmul.mubr.f32.gmra.mrb[0].mxu0 %v581
        %v678 = vpop.f32.mrb[0].mxu0
        %v679 = vadd.f32 0.0, %v678
        %v680 = vpop.f32.mrb[0].mxu0
        %681 = vmatprep.mubr.f32.mxu0 0.0
        %682 = vmatmul.mubr.f32.gmra.mrb[0].mxu0 %v584
        %v683 = vpop.f32.mrb[0].mxu0
        %v684 = vadd.f32 0.0, %v683
        %v685 = vpop.f32.mrb[0].mxu0
        %686 = vmatprep.mubr.f32.mxu0 0.0
        %687 = vmatmul.mubr.f32.gmra.mrb[0].mxu0 %v587
        %v688 = vpop.f32.mrb[0].mxu0
        %v689 = vadd.f32 0.0, %v688
        %v690 = vpop.f32.mrb[0].mxu0
        %691 = vmatprep.mubr.f32.mxu0 0.0
        %692 = vmatmul.mubr.f32.gmra.mrb[0].mxu0 %v590
        %v693 = vpop.f32.mrb[0].mxu0
        %v694 = vadd.f32 0.0, %v693
        %v695 = vpop.f32.mrb[0].mxu0
        %696 = vmatprep.mubr.f32.mxu0 0.0
        %697 = vmatmul.mubr.f32.gmra.mrb[0].mxu0 %v593
        %v698 = vpop.f32.mrb[0].mxu0
        %v699 = vadd.f32 0.0, %v698
        %v700 = vpop.f32.mrb[0].mxu0
        %701 = vmatprep.mubr.f32.mxu0 0.0
        %702 = vmatmul.mubr.f32.gmra.mrb[0].mxu0 %v596
        %v703 = vpop.f32.mrb[0].mxu0
        %v704 = vadd.f32 0.0, %v703
        %v705 = vpop.f32.mrb[0].mxu0
        %706 = vdwg.mxu0
        %vm707 = vcmask 236544
        %v709 = vsel %vm707, %v552, 0
        %v712 = vsel %vm707, %v553, 0
        %v715 = vsel %vm707, %v554, 0
        %v718 = vsel %vm707, %v555, 0
        %v721 = vsel %vm707, %v556, 0
        %v724 = vsel %vm707, %v557, 0
        %v727 = vsel %vm707, %v558, 0
        %v730 = vsel %vm707, %v559, 0
        %vm732 = vcmask 1044480
        %v734 = vsel %vm732, %v563, 0
        %736 = vmatprep.subr.mxu0 0.0
        %737 = vmatpush1.msra.mxu0 %v560
        %738 = vmatprep.subr.mxu0 0.0
        %739 = vmatpush1.msra.mxu0 %v561
        %740 = vmatprep.subr.mxu0 0.0
        %741 = vmatpush1.msra.mxu0 %v562
        %742 = vmatprep.subr.mxu0 0.0
        %743 = vmatpush1.msra.mxu0 %v734
        %744 = vmatprep.subr.mxu0 0.0
        %745 = vmatpush1.msra.mxu0 0.0
        %746 = vmatprep.subr.mxu0 0.0
        %747 = vmatpush1.msra.mxu0 0.0
        %748 = vmatprep.subr.mxu0 0.0
        %749 = vmatpush1.msra.mxu0 0.0
        %750 = vmatprep.subr.mxu0 0.0
        %751 = vmatpush1.msra.mxu0 0.0
        %752 = vmatprep.subr.mxu0 0.0
        %753 = vmatpush1.msra.mxu0 0.0
        %754 = vmatprep.subr.mxu0 0.0
        %755 = vmatpush1.msra.mxu0 0.0
        %756 = vmatprep.subr.mxu0 0.0
        %757 = vmatpush1.msra.mxu0 0.0
        %758 = vmatprep.subr.mxu0 0.0
        %759 = vmatpush1.msra.mxu0 0.0
        %760 = vmatprep.subr.mxu0 0.0
        %761 = vmatpush1.msra.mxu0 0.0
        %762 = vmatprep.subr.mxu0 0.0
        %763 = vmatpush1.msra.mxu0 0.0
        %764 = vmatprep.subr.mxu0 0.0
        %765 = vmatpush1.msra.mxu0 0.0
        %766 = vmatprep.subr.mxu0 0.0
        %767 = vmatpush1.msra.mxu0 0.0
        %768 = vmatprep.subr.mxu0 0.0
        %769 = vmatpush1.msra.mxu0 0.0
        %770 = vmatprep.subr.mxu0 0.0
        %771 = vmatpush1.msra.mxu0 0.0
        %772 = vmatprep.subr.mxu0 0.0
        %773 = vmatpush1.msra.mxu0 0.0
        %774 = vmatprep.subr.mxu0 0.0
        %775 = vmatpush1.msra.mxu0 0.0
        %776 = vmatprep.subr.mxu0 0.0
        %777 = vmatpush1.msra.mxu0 0.0
        %778 = vmatprep.subr.mxu0 0.0
        %779 = vmatpush1.msra.mxu0 0.0
        %780 = vmatprep.subr.mxu0 0.0
        %781 = vmatpush1.msra.mxu0 0.0
        %782 = vmatprep.subr.mxu0 0.0
        %783 = vmatpush1.msra.mxu0 0.0
        %784 = vmatprep.subr.mxu0 0.0
        %785 = vmatpush1.msra.mxu0 0.0
        %786 = vmatprep.subr.mxu0 0.0
        %787 = vmatpush1.msra.mxu0 0.0
        %788 = vmatprep.subr.mxu0 0.0
        %789 = vmatpush1.msra.mxu0 0.0
        %790 = vmatprep.subr.mxu0 0.0
        %791 = vmatpush1.msra.mxu0 0.0
        %792 = vmatprep.subr.mxu0 0.0
        %793 = vmatpush1.msra.mxu0 0.0
        %794 = vmatprep.subr.mxu0 0.0
        %795 = vmatpush1.msra.mxu0 0.0
        %796 = vmatprep.subr.mxu0 0.0
        %797 = vmatpush1.msra.mxu0 0.0
        %798 = vmatprep.subr.mxu0 0.0
        %799 = vmatpush1.msra.mxu0 0.0
        %800 = vmatprep.mubr.f32.mxu0 0.0
        %801 = vmatmul.mubr.f32.gmra.mrb[0].mxu0 %v709
        %v802 = vpop.f32.mrb[0].mxu0
        %v803 = vadd.f32 %v669, %v802
        %v804 = vpop.f32.mrb[0].mxu0
        %805 = vmatprep.mubr.f32.mxu0 0.0
        %806 = vmatmul.mubr.f32.gmra.mrb[0].mxu0 %v712
        %v807 = vpop.f32.mrb[0].mxu0
        %v808 = vadd.f32 %v674, %v807
        %v809 = vpop.f32.mrb[0].mxu0
        %810 = vmatprep.mubr.f32.mxu0 0.0
        %811 = vmatmul.mubr.f32.gmra.mrb[0].mxu0 %v715
        %v812 = vpop.f32.mrb[0].mxu0
        %v813 = vadd.f32 %v679, %v812
        %v814 = vpop.f32.mrb[0].mxu0
        %815 = vmatprep.mubr.f32.mxu0 0.0
        %816 = vmatmul.mubr.f32.gmra.mrb[0].mxu0 %v718
        %v817 = vpop.f32.mrb[0].mxu0
        %v818 = vadd.f32 %v684, %v817
        %v819 = vpop.f32.mrb[0].mxu0
        %820 = vmatprep.mubr.f32.mxu0 0.0
        %821 = vmatmul.mubr.f32.gmra.mrb[0].mxu0 %v721
        %v822 = vpop.f32.mrb[0].mxu0
        %v823 = vadd.f32 %v689, %v822
        %v824 = vpop.f32.mrb[0].mxu0
        %825 = vmatprep.mubr.f32.mxu0 0.0
        %826 = vmatmul.mubr.f32.gmra.mrb[0].mxu0 %v724
        %v827 = vpop.f32.mrb[0].mxu0
        %v828 = vadd.f32 %v694, %v827
        %v829 = vpop.f32.mrb[0].mxu0
        %830 = vmatprep.mubr.f32.mxu0 0.0
        %831 = vmatmul.mubr.f32.gmra.mrb[0].mxu0 %v727
        %v832 = vpop.f32.mrb[0].mxu0
        %v833 = vadd.f32 %v699, %v832
        %v834 = vpop.f32.mrb[0].mxu0
        %835 = vmatprep.mubr.f32.mxu0 0.0
        %836 = vmatmul.mubr.f32.gmra.mrb[0].mxu0 %v730
        %v837 = vpop.f32.mrb[0].mxu0
        %v838 = vadd.f32 %v704, %v837
        %v839 = vpop.f32.mrb[0].mxu0
        %840 = vdwg.mxu0
        %v841 = vmax.f32 %v803, 0.0
        %v842 = vmax.f32 %v808, 0.0
        %v843 = vmax.f32 %v813, 0.0
        %v844 = vmax.f32 %v818, 0.0
        %v845 = vmax.f32 %v823, 0.0
        %v846 = vmax.f32 %v828, 0.0
        %v847 = vmax.f32 %v833, 0.0
        %v848 = vmax.f32 %v838, 0.0
        %v849 = vld [vmem:[%s7] sm:$0xff]
        %v850 = vld [vmem:[%s7 + $0x8] sm:$0xff]
        %v851 = vld [vmem:[%s7 + $0x10] sm:$0xff]
        %v852 = vld [vmem:[%s7 + $0x18] sm:$0xff]
        %v853 = vld [vmem:[%s7 + $0x20] sm:$0xff]
        %v854 = vld [vmem:[%s7 + $0x28] sm:$0xff]
        %v855 = vld [vmem:[%s7 + $0x30] sm:$0xff]
        %v856 = vld [vmem:[%s7 + $0x38] sm:$0xff]
        %vm857 = vcmask 523264
        %v859 = vsel %vm857, %v841, 0
        %v862 = vsel %vm857, %v842, 0
        %v865 = vsel %vm857, %v843, 0
        %v868 = vsel %vm857, %v844, 0
        %v871 = vsel %vm857, %v845, 0
        %v874 = vsel %vm857, %v846, 0
        %v877 = vsel %vm857, %v847, 0
        %v880 = vsel %vm857, %v848, 0
        %882 = vmatprep.subr.mxu0 0.0
        %883 = vmatpush1.msra.mxu0 %v849
        %884 = vmatprep.subr.mxu0 0.0
        %885 = vmatpush1.msra.mxu0 %v850
        %886 = vmatprep.subr.mxu0 0.0
        %887 = vmatpush1.msra.mxu0 %v851
        %888 = vmatprep.subr.mxu0 0.0
        %889 = vmatpush1.msra.mxu0 %v852
        %890 = vmatprep.subr.mxu0 0.0
        %891 = vmatpush1.msra.mxu0 %v853
        %892 = vmatprep.subr.mxu0 0.0
        %893 = vmatpush1.msra.mxu0 %v854
        %894 = vmatprep.subr.mxu0 0.0
        %895 = vmatpush1.msra.mxu0 %v855
        %896 = vmatprep.subr.mxu0 0.0
        %897 = vmatpush1.msra.mxu0 %v856
        %898 = vmatprep.subr.mxu0 0.0
        %899 = vmatpush1.msra.mxu0 0.0
        %900 = vmatprep.subr.mxu0 0.0
        %901 = vmatpush1.msra.mxu0 0.0
        %902 = vmatprep.subr.mxu0 0.0
        %903 = vmatpush1.msra.mxu0 0.0
        %904 = vmatprep.subr.mxu0 0.0
        %905 = vmatpush1.msra.mxu0 0.0
        %906 = vmatprep.subr.mxu0 0.0
        %907 = vmatpush1.msra.mxu0 0.0
        %908 = vmatprep.subr.mxu0 0.0
        %909 = vmatpush1.msra.mxu0 0.0
        %910 = vmatprep.subr.mxu0 0.0
        %911 = vmatpush1.msra.mxu0 0.0
        %912 = vmatprep.subr.mxu0 0.0
        %913 = vmatpush1.msra.mxu0 0.0
        %914 = vmatprep.subr.mxu0 0.0
        %915 = vmatpush1.msra.mxu0 0.0
        %916 = vmatprep.subr.mxu0 0.0
        %917 = vmatpush1.msra.mxu0 0.0
        %918 = vmatprep.subr.mxu0 0.0
        %919 = vmatpush1.msra.mxu0 0.0
        %920 = vmatprep.subr.mxu0 0.0
        %921 = vmatpush1.msra.mxu0 0.0
        %922 = vmatprep.subr.mxu0 0.0
        %923 = vmatpush1.msra.mxu0 0.0
        %924 = vmatprep.subr.mxu0 0.0
        %925 = vmatpush1.msra.mxu0 0.0
        %926 = vmatprep.subr.mxu0 0.0
        %927 = vmatpush1.msra.mxu0 0.0
        %928 = vmatprep.subr.mxu0 0.0
        %929 = vmatpush1.msra.mxu0 0.0
        %930 = vmatprep.subr.mxu0 0.0
        %931 = vmatpush1.msra.mxu0 0.0
        %932 = vmatprep.subr.mxu0 0.0
        %933 = vmatpush1.msra.mxu0 0.0
        %934 = vmatprep.subr.mxu0 0.0
        %935 = vmatpush1.msra.mxu0 0.0
        %936 = vmatprep.subr.mxu0 0.0
        %937 = vmatpush1.msra.mxu0 0.0
        %938 = vmatprep.subr.mxu0 0.0
        %939 = vmatpush1.msra.mxu0 0.0
        %940 = vmatprep.subr.mxu0 0.0
        %941 = vmatpush1.msra.mxu0 0.0
        %942 = vmatprep.subr.mxu0 0.0
        %943 = vmatpush1.msra.mxu0 0.0
        %944 = vmatprep.subr.mxu0 0.0
        %945 = vmatpush1.msra.mxu0 0.0
        %946 = vmatprep.mubr.f32.mxu0 0.0
        %947 = vmatmul.mubr.f32.gmra.mrb[0].mxu0 %v859
        %v948 = vpop.f32.mrb[0].mxu0
        %v949 = vadd.f32 0.0, %v948
        %v950 = vpop.f32.mrb[0].mxu0
        %951 = vmatprep.mubr.f32.mxu0 0.0
        %952 = vmatmul.mubr.f32.gmra.mrb[0].mxu0 %v862
        %v953 = vpop.f32.mrb[0].mxu0
        %v954 = vadd.f32 0.0, %v953
        %v955 = vpop.f32.mrb[0].mxu0
        %956 = vmatprep.mubr.f32.mxu0 0.0
        %957 = vmatmul.mubr.f32.gmra.mrb[0].mxu0 %v865
        %v958 = vpop.f32.mrb[0].mxu0
        %v959 = vadd.f32 0.0, %v958
        %v960 = vpop.f32.mrb[0].mxu0
        %961 = vmatprep.mubr.f32.mxu0 0.0
        %962 = vmatmul.mubr.f32.gmra.mrb[0].mxu0 %v868
        %v963 = vpop.f32.mrb[0].mxu0
        %v964 = vadd.f32 0.0, %v963
        %v965 = vpop.f32.mrb[0].mxu0
        %966 = vmatprep.mubr.f32.mxu0 0.0
        %967 = vmatmul.mubr.f32.gmra.mrb[0].mxu0 %v871
        %v968 = vpop.f32.mrb[0].mxu0
        %v969 = vadd.f32 0.0, %v968
        %v970 = vpop.f32.mrb[0].mxu0
        %971 = vmatprep.mubr.f32.mxu0 0.0
        %972 = vmatmul.mubr.f32.gmra.mrb[0].mxu0 %v874
        %v973 = vpop.f32.mrb[0].mxu0
        %v974 = vadd.f32 0.0, %v973
        %v975 = vpop.f32.mrb[0].mxu0
        %976 = vmatprep.mubr.f32.mxu0 0.0
        %977 = vmatmul.mubr.f32.gmra.mrb[0].mxu0 %v877
        %v978 = vpop.f32.mrb[0].mxu0
        %v979 = vadd.f32 0.0, %v978
        %v980 = vpop.f32.mrb[0].mxu0
        %981 = vmatprep.mubr.f32.mxu0 0.0
        %982 = vmatmul.mubr.f32.gmra.mrb[0].mxu0 %v880
        %v983 = vpop.f32.mrb[0].mxu0
        %v984 = vadd.f32 0.0, %v983
        %v985 = vpop.f32.mrb[0].mxu0
        %986 = vdwg.mxu0
        %v987 = vmax.f32 %v949, 0.0
        %v988 = vmax.f32 %v954, 0.0
        %v989 = vmax.f32 %v959, 0.0
        %v990 = vmax.f32 %v964, 0.0
        %v991 = vmax.f32 %v969, 0.0
        %v992 = vmax.f32 %v974, 0.0
        %v993 = vmax.f32 %v979, 0.0
        %v994 = vmax.f32 %v984, 0.0
        %v995 = vld [vmem:[%s8] sm:$0xff]
        %v996 = vld [vmem:[%s8 + $0x8] sm:$0xff]
        %v997 = vld [vmem:[%s8 + $0x10] sm:$0xff]
        %v998 = vld [vmem:[%s8 + $0x18] sm:$0xff]
        %v999 = vld [vmem:[%s8 + $0x20] sm:$0xff]
        %v1000 = vld [vmem:[%s8 + $0x28] sm:$0xff]
        %v1001 = vld [vmem:[%s8 + $0x30] sm:$0xff]
        %v1002 = vld [vmem:[%s8 + $0x38] sm:$0xff]
        %v1004 = vsel %vm857, %v987, 0
        %v1007 = vsel %vm857, %v988, 0
        %v1010 = vsel %vm857, %v989, 0
        %v1013 = vsel %vm857, %v990, 0
        %v1016 = vsel %vm857, %v991, 0
        %v1019 = vsel %vm857, %v992, 0
        %v1022 = vsel %vm857, %v993, 0
        %v1025 = vsel %vm857, %v994, 0
        %1027 = vmatprep.subr.mxu0 0.0
        %1028 = vmatpush1.msra.mxu0 %v995
        %1029 = vmatprep.subr.mxu0 0.0
        %1030 = vmatpush1.msra.mxu0 %v996
        %1031 = vmatprep.subr.mxu0 0.0
        %1032 = vmatpush1.msra.mxu0 %v997
        %1033 = vmatprep.subr.mxu0 0.0
        %1034 = vmatpush1.msra.mxu0 %v998
        %1035 = vmatprep.subr.mxu0 0.0
        %1036 = vmatpush1.msra.mxu0 %v999
        %1037 = vmatprep.subr.mxu0 0.0
        %1038 = vmatpush1.msra.mxu0 %v1000
        %1039 = vmatprep.subr.mxu0 0.0
        %1040 = vmatpush1.msra.mxu0 %v1001
        %1041 = vmatprep.subr.mxu0 0.0
        %1042 = vmatpush1.msra.mxu0 %v1002
        %1043 = vmatprep.subr.mxu0 0.0
        %1044 = vmatpush1.msra.mxu0 0.0
        %1045 = vmatprep.subr.mxu0 0.0
        %1046 = vmatpush1.msra.mxu0 0.0
        %1047 = vmatprep.subr.mxu0 0.0
        %1048 = vmatpush1.msra.mxu0 0.0
        %1049 = vmatprep.subr.mxu0 0.0
        %1050 = vmatpush1.msra.mxu0 0.0
        %1051 = vmatprep.subr.mxu0 0.0
        %1052 = vmatpush1.msra.mxu0 0.0
        %1053 = vmatprep.subr.mxu0 0.0
        %1054 = vmatpush1.msra.mxu0 0.0
        %1055 = vmatprep.subr.mxu0 0.0
        %1056 = vmatpush1.msra.mxu0 0.0
        %1057 = vmatprep.subr.mxu0 0.0
        %1058 = vmatpush1.msra.mxu0 0.0
        %1059 = vmatprep.subr.mxu0 0.0
        %1060 = vmatpush1.msra.mxu0 0.0
        %1061 = vmatprep.subr.mxu0 0.0
        %1062 = vmatpush1.msra.mxu0 0.0
        %1063 = vmatprep.subr.mxu0 0.0
        %1064 = vmatpush1.msra.mxu0 0.0
        %1065 = vmatprep.subr.mxu0 0.0
        %1066 = vmatpush1.msra.mxu0 0.0
        %1067 = vmatprep.subr.mxu0 0.0
        %1068 = vmatpush1.msra.mxu0 0.0
        %1069 = vmatprep.subr.mxu0 0.0
        %1070 = vmatpush1.msra.mxu0 0.0
        %1071 = vmatprep.subr.mxu0 0.0
        %1072 = vmatpush1.msra.mxu0 0.0
        %1073 = vmatprep.subr.mxu0 0.0
        %1074 = vmatpush1.msra.mxu0 0.0
        %1075 = vmatprep.subr.mxu0 0.0
        %1076 = vmatpush1.msra.mxu0 0.0
        %1077 = vmatprep.subr.mxu0 0.0
        %1078 = vmatpush1.msra.mxu0 0.0
        %1079 = vmatprep.subr.mxu0 0.0
        %1080 = vmatpush1.msra.mxu0 0.0
        %1081 = vmatprep.subr.mxu0 0.0
        %1082 = vmatpush1.msra.mxu0 0.0
        %1083 = vmatprep.subr.mxu0 0.0
        %1084 = vmatpush1.msra.mxu0 0.0
        %1085 = vmatprep.subr.mxu0 0.0
        %1086 = vmatpush1.msra.mxu0 0.0
        %1087 = vmatprep.subr.mxu0 0.0
        %1088 = vmatpush1.msra.mxu0 0.0
        %1089 = vmatprep.subr.mxu0 0.0
        %1090 = vmatpush1.msra.mxu0 0.0
        %1091 = vmatprep.mubr.f32.mxu0 0.0
        %1092 = vmatmul.mubr.f32.gmra.mrb[0].mxu0 %v1004
        %v1093 = vpop.f32.mrb[0].mxu0
        %v1094 = vadd.f32 0.0, %v1093
        %v1095 = vpop.f32.mrb[0].mxu0
        %1096 = vmatprep.mubr.f32.mxu0 0.0
        %1097 = vmatmul.mubr.f32.gmra.mrb[0].mxu0 %v1007
        %v1098 = vpop.f32.mrb[0].mxu0
        %v1099 = vadd.f32 0.0, %v1098
        %v1100 = vpop.f32.mrb[0].mxu0
        %1101 = vmatprep.mubr.f32.mxu0 0.0
        %1102 = vmatmul.mubr.f32.gmra.mrb[0].mxu0 %v1010
        %v1103 = vpop.f32.mrb[0].mxu0
        %v1104 = vadd.f32 0.0, %v1103
        %v1105 = vpop.f32.mrb[0].mxu0
        %1106 = vmatprep.mubr.f32.mxu0 0.0
        %1107 = vmatmul.mubr.f32.gmra.mrb[0].mxu0 %v1013
        %v1108 = vpop.f32.mrb[0].mxu0
        %v1109 = vadd.f32 0.0, %v1108
        %v1110 = vpop.f32.mrb[0].mxu0
        %1111 = vmatprep.mubr.f32.mxu0 0.0
        %1112 = vmatmul.mubr.f32.gmra.mrb[0].mxu0 %v1016
        %v1113 = vpop.f32.mrb[0].mxu0
        %v1114 = vadd.f32 0.0, %v1113
        %v1115 = vpop.f32.mrb[0].mxu0
        %1116 = vmatprep.mubr.f32.mxu0 0.0
        %1117 = vmatmul.mubr.f32.gmra.mrb[0].mxu0 %v1019
        %v1118 = vpop.f32.mrb[0].mxu0
        %v1119 = vadd.f32 0.0, %v1118
        %v1120 = vpop.f32.mrb[0].mxu0
        %1121 = vmatprep.mubr.f32.mxu0 0.0
        %1122 = vmatmul.mubr.f32.gmra.mrb[0].mxu0 %v1022
        %v1123 = vpop.f32.mrb[0].mxu0
        %v1124 = vadd.f32 0.0, %v1123
        %v1125 = vpop.f32.mrb[0].mxu0
        %1126 = vmatprep.mubr.f32.mxu0 0.0
        %1127 = vmatmul.mubr.f32.gmra.mrb[0].mxu0 %v1025
        %v1128 = vpop.f32.mrb[0].mxu0
        %v1129 = vadd.f32 0.0, %v1128
        %v1130 = vpop.f32.mrb[0].mxu0
        %1131 = vdwg.mxu0
        %v1132 = vld [vmem:[%s539] sm:$0xff]
        %v1133 = vld [vmem:[%s543] sm:$0xff]
        %v1134 = vmul.f32 %v1133, %v1133
        %v1135 = vsel %vm573, %v1134, 0.0
        %1136 = vadd.xlane.f32.xlu0 %v1135
        %v1137 = vpop.xlane.xlu0 %1136
        %v1138 = vrsqrt.pop %v1137
        %v1139 = vmul.f32 %v1137, %v1138
        %vm1140 = vcmp.eq.f32.partialorder %v1137, inf
        %v1141 = vsel %vm1140, %v1137, %v1139
        %vm1142 = vcmp.eq.f32.partialorder %v1137, 0.0
        %v1143 = vand.u32 %v1137, 2147483648
        %v1144 = vsel %vm1142, %v1143, %v1141
        %1146 = vrot.lane.b32.xlu0 %v1132, 1
        %v1147 = vpop.permute.xlu0 %1146
        %v1149 = vsub.f32 %v1132, %v1147
        %v1150 = vmul.f32 %v1149, %v1144
        %v1151 = vxor.u32 %v1094, 2147483648
        %v1152 = vxor.u32 %v1099, 2147483648
        %v1153 = vxor.u32 %v1104, 2147483648
        %v1154 = vxor.u32 %v1109, 2147483648
        %v1155 = vxor.u32 %v1114, 2147483648
        %v1156 = vxor.u32 %v1119, 2147483648
        %v1157 = vxor.u32 %v1124, 2147483648
        %v1158 = vxor.u32 %v1129, 2147483648
        %v1159 = vmul.f32 %v1151, 1.442695
        %v1160 = vpow.pop %v1159
        %v1161 = vmul.f32 %v1152, 1.442695
        %v1162 = vpow.pop %v1161
        %v1163 = vmul.f32 %v1153, 1.442695
        %v1164 = vpow.pop %v1163
        %v1165 = vmul.f32 %v1154, 1.442695
        %v1166 = vpow.pop %v1165
        %v1167 = vmul.f32 %v1155, 1.442695
        %v1168 = vpow.pop %v1167
        %v1169 = vmul.f32 %v1156, 1.442695
        %v1170 = vpow.pop %v1169
        %v1171 = vmul.f32 %v1157, 1.442695
        %v1172 = vpow.pop %v1171
        %v1173 = vmul.f32 %v1158, 1.442695
        %v1174 = vpow.pop %v1173
        %v1175 = vadd.f32 %v1160, 1.0
        %v1176 = vadd.f32 %v1162, 1.0
        %v1177 = vadd.f32 %v1164, 1.0
        %v1178 = vadd.f32 %v1166, 1.0
        %v1179 = vadd.f32 %v1168, 1.0
        %v1180 = vadd.f32 %v1170, 1.0
        %v1181 = vadd.f32 %v1172, 1.0
        %v1182 = vadd.f32 %v1174, 1.0
        %v1183 = vrcp.pop %v1175
        %v1184 = vmul.f32 1.0, %v1183
        %v1185 = vrcp.pop %v1176
        %v1186 = vmul.f32 1.0, %v1185
        %v1187 = vrcp.pop %v1177
        %v1188 = vmul.f32 1.0, %v1187
        %v1189 = vrcp.pop %v1178
        %v1190 = vmul.f32 1.0, %v1189
        %v1191 = vrcp.pop %v1179
        %v1192 = vmul.f32 1.0, %v1191
        %v1193 = vrcp.pop %v1180
        %v1194 = vmul.f32 1.0, %v1193
        %v1195 = vrcp.pop %v1181
        %v1196 = vmul.f32 1.0, %v1195
        %v1197 = vrcp.pop %v1182
        %v1198 = vmul.f32 1.0, %v1197
        %v1199 = vmax.f32 %v1094, 0.0
        %v1200 = vmax.f32 %v1099, 0.0
        %v1201 = vmax.f32 %v1104, 0.0
        %v1202 = vmax.f32 %v1109, 0.0
        %v1203 = vmax.f32 %v1114, 0.0
        %v1204 = vmax.f32 %v1119, 0.0
        %v1205 = vmax.f32 %v1124, 0.0
        %v1206 = vmax.f32 %v1129, 0.0
        %v1207 = vsub.f32 0.0, %v1199
        %v1208 = vsub.f32 0.0, %v1200
        %v1209 = vsub.f32 0.0, %v1201
        %v1210 = vsub.f32 0.0, %v1202
        %v1211 = vsub.f32 0.0, %v1203
        %v1212 = vsub.f32 0.0, %v1204
        %v1213 = vsub.f32 0.0, %v1205
        %v1214 = vsub.f32 0.0, %v1206
        %v1216 = vlaneseq
        %v1217 = vshrl.u32 %v1216, 7
        %v1218 = vsub.s32 0, %v1217
        %v1219 = vrot.slane %v1150, %v1218
        %s1221 = sor.u32 256, 1
        %1222 = vbcast.lane.b32.xlu0 %v1219, %s1221
        %v1223 = vpop.permute.xlu0 %1222
        %v1224 = vlaneseq
        %v1225 = vshrl.u32 %v1224, 7
        %v1226 = vsub.s32 1, %v1225
        %v1227 = vrot.slane %v1150, %v1226
        %s1229 = sor.u32 256, 1
        %1230 = vbcast.lane.b32.xlu0 %v1227, %s1229
        %v1231 = vpop.permute.xlu0 %1230
        %v1232 = vlaneseq
        %v1233 = vshrl.u32 %v1232, 7
        %v1234 = vsub.s32 2, %v1233
        %v1235 = vrot.slane %v1150, %v1234
        %s1237 = sor.u32 256, 1
        %1238 = vbcast.lane.b32.xlu0 %v1235, %s1237
        %v1239 = vpop.permute.xlu0 %1238
        %v1240 = vlaneseq
        %v1241 = vshrl.u32 %v1240, 7
        %v1242 = vsub.s32 3, %v1241
        %v1243 = vrot.slane %v1150, %v1242
        %s1245 = sor.u32 256, 1
        %1246 = vbcast.lane.b32.xlu0 %v1243, %s1245
        %v1247 = vpop.permute.xlu0 %1246
        %v1248 = vlaneseq
        %v1249 = vshrl.u32 %v1248, 7
        %v1250 = vsub.s32 4, %v1249
        %v1251 = vrot.slane %v1150, %v1250
        %s1253 = sor.u32 256, 1
        %1254 = vbcast.lane.b32.xlu0 %v1251, %s1253
        %v1255 = vpop.permute.xlu0 %1254
        %v1256 = vlaneseq
        %v1257 = vshrl.u32 %v1256, 7
        %v1258 = vsub.s32 5, %v1257
        %v1259 = vrot.slane %v1150, %v1258
        %s1261 = sor.u32 256, 1
        %1262 = vbcast.lane.b32.xlu0 %v1259, %s1261
        %v1263 = vpop.permute.xlu0 %1262
        %v1264 = vlaneseq
        %v1265 = vshrl.u32 %v1264, 7
        %v1266 = vsub.s32 6, %v1265
        %v1267 = vrot.slane %v1150, %v1266
        %s1269 = sor.u32 256, 1
        %1270 = vbcast.lane.b32.xlu0 %v1267, %s1269
        %v1271 = vpop.permute.xlu0 %1270
        %v1272 = vlaneseq
        %v1273 = vshrl.u32 %v1272, 7
        %v1274 = vsub.s32 7, %v1273
        %v1275 = vrot.slane %v1150, %v1274
        %s1277 = sor.u32 256, 1
        %1278 = vbcast.lane.b32.xlu0 %v1275, %s1277
        %v1279 = vpop.permute.xlu0 %1278
        %v1288 = vmul.f32 %v1207, %v1223
        %v1289 = vmul.f32 %v1208, %v1231
        %v1290 = vmul.f32 %v1209, %v1239
        %v1291 = vmul.f32 %v1210, %v1247
        %v1292 = vmul.f32 %v1211, %v1255
        %v1293 = vmul.f32 %v1212, %v1263
        %v1294 = vmul.f32 %v1213, %v1271
        %v1295 = vmul.f32 %v1214, %v1279
        %v1296 = vmul.f32 %v1288, 1.442695
        %v1297 = vpow.pop %v1296
        %v1298 = vmul.f32 %v1289, 1.442695
        %v1299 = vpow.pop %v1298
        %v1300 = vmul.f32 %v1290, 1.442695
        %v1301 = vpow.pop %v1300
        %v1302 = vmul.f32 %v1291, 1.442695
        %v1303 = vpow.pop %v1302
        %v1304 = vmul.f32 %v1292, 1.442695
        %v1305 = vpow.pop %v1304
        %v1306 = vmul.f32 %v1293, 1.442695
        %v1307 = vpow.pop %v1306
        %v1308 = vmul.f32 %v1294, 1.442695
        %v1309 = vpow.pop %v1308
        %v1310 = vmul.f32 %v1295, 1.442695
        %v1311 = vpow.pop %v1310
        %v1312 = vsub.f32 1.0, %v1297
        %v1313 = vsub.f32 1.0, %v1299
        %v1314 = vsub.f32 1.0, %v1301
        %v1315 = vsub.f32 1.0, %v1303
        %v1316 = vsub.f32 1.0, %v1305
        %v1317 = vsub.f32 1.0, %v1307
        %v1318 = vsub.f32 1.0, %v1309
        %v1319 = vsub.f32 1.0, %v1311
        %1328 = vset.pattern.permute.xlu0 0
        %1329 = vperm.xlu0 %1328, %v1312
        %v1330 = vpop.permute.xlu0 %1329
        %1331 = vset.pattern.permute.xlu0 0
        %1332 = vperm.xlu0 %1331, %v1313
        %v1333 = vpop.permute.xlu0 %1332
        %1334 = vset.pattern.permute.xlu0 0
        %1335 = vperm.xlu0 %1334, %v1314
        %v1336 = vpop.permute.xlu0 %1335
        %1337 = vset.pattern.permute.xlu0 0
        %1338 = vperm.xlu0 %1337, %v1315
        %v1339 = vpop.permute.xlu0 %1338
        %1340 = vset.pattern.permute.xlu0 0
        %1341 = vperm.xlu0 %1340, %v1316
        %v1342 = vpop.permute.xlu0 %1341
        %1343 = vset.pattern.permute.xlu0 0
        %1344 = vperm.xlu0 %1343, %v1317
        %v1345 = vpop.permute.xlu0 %1344
        %1346 = vset.pattern.permute.xlu0 0
        %1347 = vperm.xlu0 %1346, %v1318
        %v1348 = vpop.permute.xlu0 %1347
        %1349 = vset.pattern.permute.xlu0 0
        %1350 = vperm.xlu0 %1349, %v1319
        %v1351 = vpop.permute.xlu0 %1350
        %v1352 = vlaneseq
        %v1353 = vand.u32 %v1352, 127
        %v1354 = vlaneseq
        %v1355 = vshrl.u32 %v1354, 7
        %v1356 = vsub.s32 %v1353, %v1355
        %v1357 = vrot.slane %v1330, %v1356
        %v1358 = vlaneseq
        %v1359 = vshrl.u32 %v1358, 7
        %v1360 = vsub.s32 %v1353, %v1359
        %v1361 = vrot.slane %v1333, %v1360
        %v1362 = vlaneseq
        %v1363 = vshrl.u32 %v1362, 7
        %v1364 = vsub.s32 %v1353, %v1363
        %v1365 = vrot.slane %v1336, %v1364
        %v1366 = vlaneseq
        %v1367 = vshrl.u32 %v1366, 7
        %v1368 = vsub.s32 %v1353, %v1367
        %v1369 = vrot.slane %v1339, %v1368
        %v1370 = vlaneseq
        %v1371 = vshrl.u32 %v1370, 7
        %v1372 = vsub.s32 %v1353, %v1371
        %v1373 = vrot.slane %v1342, %v1372
        %v1374 = vlaneseq
        %v1375 = vshrl.u32 %v1374, 7
        %v1376 = vsub.s32 %v1353, %v1375
        %v1377 = vrot.slane %v1345, %v1376
        %v1378 = vlaneseq
        %v1379 = vshrl.u32 %v1378, 7
        %v1380 = vsub.s32 %v1353, %v1379
        %v1381 = vrot.slane %v1348, %v1380
        %v1382 = vlaneseq
        %v1383 = vshrl.u32 %v1382, 7
        %v1384 = vsub.s32 %v1353, %v1383
        %v1385 = vrot.slane %v1351, %v1384
        %vm1386 = vcmask 1041409
        %v1387 = vsel %vm1386, %v1361, %v1357
        %vm1388 = vcmask 1042434
        %v1389 = vsel %vm1388, %v1365, %v1387
        %vm1390 = vcmask 1043459
        %v1391 = vsel %vm1390, %v1369, %v1389
        %vm1392 = vcmask 1044484
        %v1393 = vsel %vm1392, %v1373, %v1391
        %vm1394 = vcmask 1045509
        %v1395 = vsel %vm1394, %v1377, %v1393
        %vm1396 = vcmask 1046534
        %v1397 = vsel %vm1396, %v1381, %v1395
        %vm1398 = vcmask 1047559
        %v1399 = vsel %vm1398, %v1385, %v1397
        %vm1401 = vcmask 56320
        %v1402 = vsel %vm1401, %v1399, 1.0
        %v1403 = vsub.f32 1.0, %v1402
        %v1404 = vadd.f32 %v1403, 1e-10
        %1406 = vrot.lane.b32.xlu0 %v1404, 1
        %v1407 = vpop.permute.xlu0 %1406
        %vm1409 = vcmask 7168
        %v1410 = vsel %vm1409, 1.0, %v1407
        %v1411 = vmul.f32 %v1404, %v1410
        %1413 = vrot.lane.b32.xlu0 %v1411, 2
        %v1414 = vpop.permute.xlu0 %1413
        %vm1416 = vcmask 15360
        %v1417 = vsel %vm1416, 1.0, %v1414
        %v1418 = vmul.f32 %v1411, %v1417
        %1420 = vrot.lane.b32.xlu0 %v1418, 4
        %v1421 = vpop.permute.xlu0 %1420
        %vm1423 = vcmask 31744
        %v1424 = vsel %vm1423, 1.0, %v1421
        %v1425 = vmul.f32 %v1418, %v1424
        %1427 = vrot.lane.b32.xlu0 %v1425, 1
        %v1428 = vpop.permute.xlu0 %1427
        %v1430 = vsel %vm1409, 1.0, %v1428
        %v1431 = vmul.f32 %v1402, %v1430
        %v1432 = vlaneseq
        %v1433 = vshrl.u32 %v1432, 7
        %v1434 = vsub.s32 0, %v1433
        %v1435 = vrot.slane %v1431, %v1434
        %1437 = vbcast.lane.b32.xlu0 %v1435, 256
        %v1438 = vpop.permute.xlu0 %1437
        %v1439 = vlaneseq
        %v1440 = vshrl.u32 %v1439, 7
        %v1441 = vsub.s32 1, %v1440
        %v1442 = vrot.slane %v1431, %v1441
        %1444 = vbcast.lane.b32.xlu0 %v1442, 256
        %v1445 = vpop.permute.xlu0 %1444
        %v1446 = vlaneseq
        %v1447 = vshrl.u32 %v1446, 7
        %v1448 = vsub.s32 2, %v1447
        %v1449 = vrot.slane %v1431, %v1448
        %1451 = vbcast.lane.b32.xlu0 %v1449, 256
        %v1452 = vpop.permute.xlu0 %1451
        %v1453 = vlaneseq
        %v1454 = vshrl.u32 %v1453, 7
        %v1455 = vsub.s32 3, %v1454
        %v1456 = vrot.slane %v1431, %v1455
        %1458 = vbcast.lane.b32.xlu0 %v1456, 256
        %v1459 = vpop.permute.xlu0 %1458
        %v1460 = vlaneseq
        %v1461 = vshrl.u32 %v1460, 7
        %v1462 = vsub.s32 4, %v1461
        %v1463 = vrot.slane %v1431, %v1462
        %1465 = vbcast.lane.b32.xlu0 %v1463, 256
        %v1466 = vpop.permute.xlu0 %1465
        %v1467 = vlaneseq
        %v1468 = vshrl.u32 %v1467, 7
        %v1469 = vsub.s32 5, %v1468
        %v1470 = vrot.slane %v1431, %v1469
        %1472 = vbcast.lane.b32.xlu0 %v1470, 256
        %v1473 = vpop.permute.xlu0 %1472
        %v1474 = vlaneseq
        %v1475 = vshrl.u32 %v1474, 7
        %v1476 = vsub.s32 6, %v1475
        %v1477 = vrot.slane %v1431, %v1476
        %1479 = vbcast.lane.b32.xlu0 %v1477, 256
        %v1480 = vpop.permute.xlu0 %1479
        %v1481 = vlaneseq
        %v1482 = vshrl.u32 %v1481, 7
        %v1483 = vsub.s32 7, %v1482
        %v1484 = vrot.slane %v1431, %v1483
        %1486 = vbcast.lane.b32.xlu0 %v1484, 256
        %v1487 = vpop.permute.xlu0 %1486
        %v1488 = vmul.f32 %v1438, %v1184
        %v1489 = vmul.f32 %v1445, %v1186
        %v1490 = vmul.f32 %v1452, %v1188
        %v1491 = vmul.f32 %v1459, %v1190
        %v1492 = vmul.f32 %v1466, %v1192
        %v1493 = vmul.f32 %v1473, %v1194
        %v1494 = vmul.f32 %v1480, %v1196
        %v1495 = vmul.f32 %v1487, %v1198
        %vm1496 = vcmask 130056
        %v1497 = vsel %vm1496, %v1488, 0.0
        %v1498 = vrot.slane %v1497, 4
        %v1499 = vadd.f32 %v1497, %v1498
        %v1500 = vrot.slane %v1499, 2
        %v1501 = vadd.f32 %v1499, %v1500
        %v1502 = vrot.slane %v1501, 1
        %v1503 = vadd.f32 %v1501, %v1502
        %v1504 = vsel %vm1496, %v1489, 0.0
        %v1505 = vrot.slane %v1504, 4
        %v1506 = vadd.f32 %v1504, %v1505
        %v1507 = vrot.slane %v1506, 2
        %v1508 = vadd.f32 %v1506, %v1507
        %v1509 = vrot.slane %v1508, 1
        %v1510 = vadd.f32 %v1508, %v1509
        %v1511 = vsel %vm1496, %v1490, 0.0
        %v1512 = vrot.slane %v1511, 4
        %v1513 = vadd.f32 %v1511, %v1512
        %v1514 = vrot.slane %v1513, 2
        %v1515 = vadd.f32 %v1513, %v1514
        %v1516 = vrot.slane %v1515, 1
        %v1517 = vadd.f32 %v1515, %v1516
        %v1518 = vsel %vm1496, %v1491, 0.0
        %v1519 = vrot.slane %v1518, 4
        %v1520 = vadd.f32 %v1518, %v1519
        %v1521 = vrot.slane %v1520, 2
        %v1522 = vadd.f32 %v1520, %v1521
        %v1523 = vrot.slane %v1522, 1
        %v1524 = vadd.f32 %v1522, %v1523
        %v1525 = vsel %vm1496, %v1492, 0.0
        %v1526 = vrot.slane %v1525, 4
        %v1527 = vadd.f32 %v1525, %v1526
        %v1528 = vrot.slane %v1527, 2
        %v1529 = vadd.f32 %v1527, %v1528
        %v1530 = vrot.slane %v1529, 1
        %v1531 = vadd.f32 %v1529, %v1530
        %v1532 = vsel %vm1496, %v1493, 0.0
        %v1533 = vrot.slane %v1532, 4
        %v1534 = vadd.f32 %v1532, %v1533
        %v1535 = vrot.slane %v1534, 2
        %v1536 = vadd.f32 %v1534, %v1535
        %v1537 = vrot.slane %v1536, 1
        %v1538 = vadd.f32 %v1536, %v1537
        %v1539 = vsel %vm1496, %v1494, 0.0
        %v1540 = vrot.slane %v1539, 4
        %v1541 = vadd.f32 %v1539, %v1540
        %v1542 = vrot.slane %v1541, 2
        %v1543 = vadd.f32 %v1541, %v1542
        %v1544 = vrot.slane %v1543, 1
        %v1545 = vadd.f32 %v1543, %v1544
        %v1546 = vsel %vm1496, %v1495, 0.0
        %v1547 = vrot.slane %v1546, 4
        %v1548 = vadd.f32 %v1546, %v1547
        %v1549 = vrot.slane %v1548, 2
        %v1550 = vadd.f32 %v1548, %v1549
        %v1551 = vrot.slane %v1550, 1
        %v1552 = vadd.f32 %v1550, %v1551
        %v1553 = vmul.f32 %v1431, %v1132
        %vm1554 = vcmask 64512
        %v1555 = vsel %vm1554, %v1553, 0.0
        %1556 = vadd.xlane.f32.xlu0 %v1555
        %v1557 = vpop.xlane.xlu0 %1556
        %v1558 = vsel %vm1554, %v1431, 0.0
        %1559 = vadd.xlane.f32.xlu0 %v1558
        %v1560 = vpop.xlane.xlu0 %1559
        %v1561 = vld [vmem:[%s547] sm:$0xff]
        %v1570 = vsel %vm1386, %v1510, %v1503
        %v1571 = vsel %vm1388, %v1517, %v1570
        %v1572 = vsel %vm1390, %v1524, %v1571
        %v1573 = vsel %vm1392, %v1531, %v1572
        %v1574 = vsel %vm1394, %v1538, %v1573
        %v1575 = vsel %vm1396, %v1545, %v1574
        %v1576 = vsel %vm1398, %v1552, %v1575
        %1577 = vrot.lane.b32.xlu0 %v1576, 127
        %v1578 = vpop.permute.xlu0 %1577
        %1581 = vrot.lane.b32.xlu0 %v1561, 15
        %v1582 = vpop.permute.xlu0 %1581
        %vm1584 = vcmask 121856
        %v1585 = vsel %vm1584, %v1578, %v1582
        %v1586 = vld [vmem:[%s9] sm:$0xff]
        %v1587 = vld [vmem:[%s9 + $0x8] sm:$0xff]
        %v1588 = vld [vmem:[%s9 + $0x10] sm:$0x3]
        %vm1589 = vcmask 146432
        %v1591 = vsel %vm1589, %v1585, 0
        %vm1593 = vcmask 1041408
        %v1595 = vsel %vm1593, %v1588, 0
        %1597 = vmatprep.subr.mxu0 0.0
        %1598 = vmatpush1.msra.mxu0 %v1586
        %1599 = vmatprep.subr.mxu0 0.0
        %1600 = vmatpush1.msra.mxu0 %v1587
        %1601 = vmatprep.subr.mxu0 0.0
        %1602 = vmatpush1.msra.mxu0 %v1595
        %1603 = vmatprep.subr.mxu0 0.0
        %1604 = vmatpush1.msra.mxu0 0.0
        %1605 = vmatprep.subr.mxu0 0.0
        %1606 = vmatpush1.msra.mxu0 0.0
        %1607 = vmatprep.subr.mxu0 0.0
        %1608 = vmatpush1.msra.mxu0 0.0
        %1609 = vmatprep.subr.mxu0 0.0
        %1610 = vmatpush1.msra.mxu0 0.0
        %1611 = vmatprep.subr.mxu0 0.0
        %1612 = vmatpush1.msra.mxu0 0.0
        %1613 = vmatprep.subr.mxu0 0.0
        %1614 = vmatpush1.msra.mxu0 0.0
        %1615 = vmatprep.subr.mxu0 0.0
        %1616 = vmatpush1.msra.mxu0 0.0
        %1617 = vmatprep.subr.mxu0 0.0
        %1618 = vmatpush1.msra.mxu0 0.0
        %1619 = vmatprep.subr.mxu0 0.0
        %1620 = vmatpush1.msra.mxu0 0.0
        %1621 = vmatprep.subr.mxu0 0.0
        %1622 = vmatpush1.msra.mxu0 0.0
        %1623 = vmatprep.subr.mxu0 0.0
        %1624 = vmatpush1.msra.mxu0 0.0
        %1625 = vmatprep.subr.mxu0 0.0
        %1626 = vmatpush1.msra.mxu0 0.0
        %1627 = vmatprep.subr.mxu0 0.0
        %1628 = vmatpush1.msra.mxu0 0.0
        %1629 = vmatprep.subr.mxu0 0.0
        %1630 = vmatpush1.msra.mxu0 0.0
        %1631 = vmatprep.subr.mxu0 0.0
        %1632 = vmatpush1.msra.mxu0 0.0
        %1633 = vmatprep.subr.mxu0 0.0
        %1634 = vmatpush1.msra.mxu0 0.0
        %1635 = vmatprep.subr.mxu0 0.0
        %1636 = vmatpush1.msra.mxu0 0.0
        %1637 = vmatprep.subr.mxu0 0.0
        %1638 = vmatpush1.msra.mxu0 0.0
        %1639 = vmatprep.subr.mxu0 0.0
        %1640 = vmatpush1.msra.mxu0 0.0
        %1641 = vmatprep.subr.mxu0 0.0
        %1642 = vmatpush1.msra.mxu0 0.0
        %1643 = vmatprep.subr.mxu0 0.0
        %1644 = vmatpush1.msra.mxu0 0.0
        %1645 = vmatprep.subr.mxu0 0.0
        %1646 = vmatpush1.msra.mxu0 0.0
        %1647 = vmatprep.subr.mxu0 0.0
        %1648 = vmatpush1.msra.mxu0 0.0
        %1649 = vmatprep.subr.mxu0 0.0
        %1650 = vmatpush1.msra.mxu0 0.0
        %1651 = vmatprep.subr.mxu0 0.0
        %1652 = vmatpush1.msra.mxu0 0.0
        %1653 = vmatprep.subr.mxu0 0.0
        %1654 = vmatpush1.msra.mxu0 0.0
        %1655 = vmatprep.subr.mxu0 0.0
        %1656 = vmatpush1.msra.mxu0 0.0
        %1657 = vmatprep.subr.mxu0 0.0
        %1658 = vmatpush1.msra.mxu0 0.0
        %1659 = vmatprep.subr.mxu0 0.0
        %1660 = vmatpush1.msra.mxu0 0.0
        %1661 = vmatprep.mubr.f32.mxu0 0.0
        %1662 = vmatmul.mubr.f32.gmra.mrb[0].mxu0 %v1591
        %v1663 = vpop.f32.mrb[0].mxu0
        %v1664 = vadd.f32 0.0, %v1663
        %v1665 = vpop.f32.mrb[0].mxu0
        %1666 = vdwg.mxu0
        %v1667 = vmax.f32 %v1664, 0.0
        %v1668 = vld [vmem:[%s10] sm:$0xff]
        %v1669 = vld [vmem:[%s10 + $0x8] sm:$0xff]
        %v1670 = vld [vmem:[%s10 + $0x10] sm:$0xff]
        %v1671 = vld [vmem:[%s10 + $0x18] sm:$0xff]
        %v1672 = vld [vmem:[%s10 + $0x20] sm:$0xff]
        %v1673 = vld [vmem:[%s10 + $0x28] sm:$0xff]
        %v1674 = vld [vmem:[%s10 + $0x30] sm:$0xff]
        %v1675 = vld [vmem:[%s10 + $0x38] sm:$0xff]
        %v1677 = vsel %vm857, %v1667, 0
        %1679 = vmatprep.subr.mxu0 0.0
        %1680 = vmatpush1.msra.mxu0 %v1668
        %1681 = vmatprep.subr.mxu0 0.0
        %1682 = vmatpush1.msra.mxu0 %v1669
        %1683 = vmatprep.subr.mxu0 0.0
        %1684 = vmatpush1.msra.mxu0 %v1670
        %1685 = vmatprep.subr.mxu0 0.0
        %1686 = vmatpush1.msra.mxu0 %v1671
        %1687 = vmatprep.subr.mxu0 0.0
        %1688 = vmatpush1.msra.mxu0 %v1672
        %1689 = vmatprep.subr.mxu0 0.0
        %1690 = vmatpush1.msra.mxu0 %v1673
        %1691 = vmatprep.subr.mxu0 0.0
        %1692 = vmatpush1.msra.mxu0 %v1674
        %1693 = vmatprep.subr.mxu0 0.0
        %1694 = vmatpush1.msra.mxu0 %v1675
        %1695 = vmatprep.subr.mxu0 0.0
        %1696 = vmatpush1.msra.mxu0 0.0
        %1697 = vmatprep.subr.mxu0 0.0
        %1698 = vmatpush1.msra.mxu0 0.0
        %1699 = vmatprep.subr.mxu0 0.0
        %1700 = vmatpush1.msra.mxu0 0.0
        %1701 = vmatprep.subr.mxu0 0.0
        %1702 = vmatpush1.msra.mxu0 0.0
        %1703 = vmatprep.subr.mxu0 0.0
        %1704 = vmatpush1.msra.mxu0 0.0
        %1705 = vmatprep.subr.mxu0 0.0
        %1706 = vmatpush1.msra.mxu0 0.0
        %1707 = vmatprep.subr.mxu0 0.0
        %1708 = vmatpush1.msra.mxu0 0.0
        %1709 = vmatprep.subr.mxu0 0.0
        %1710 = vmatpush1.msra.mxu0 0.0
        %1711 = vmatprep.subr.mxu0 0.0
        %1712 = vmatpush1.msra.mxu0 0.0
        %1713 = vmatprep.subr.mxu0 0.0
        %1714 = vmatpush1.msra.mxu0 0.0
        %1715 = vmatprep.subr.mxu0 0.0
        %1716 = vmatpush1.msra.mxu0 0.0
        %1717 = vmatprep.subr.mxu0 0.0
        %1718 = vmatpush1.msra.mxu0 0.0
        %1719 = vmatprep.subr.mxu0 0.0
        %1720 = vmatpush1.msra.mxu0 0.0
        %1721 = vmatprep.subr.mxu0 0.0
        %1722 = vmatpush1.msra.mxu0 0.0
        %1723 = vmatprep.subr.mxu0 0.0
        %1724 = vmatpush1.msra.mxu0 0.0
        %1725 = vmatprep.subr.mxu0 0.0
        %1726 = vmatpush1.msra.mxu0 0.0
        %1727 = vmatprep.subr.mxu0 0.0
        %1728 = vmatpush1.msra.mxu0 0.0
        %1729 = vmatprep.subr.mxu0 0.0
        %1730 = vmatpush1.msra.mxu0 0.0
        %1731 = vmatprep.subr.mxu0 0.0
        %1732 = vmatpush1.msra.mxu0 0.0
        %1733 = vmatprep.subr.mxu0 0.0
        %1734 = vmatpush1.msra.mxu0 0.0
        %1735 = vmatprep.subr.mxu0 0.0
        %1736 = vmatpush1.msra.mxu0 0.0
        %1737 = vmatprep.subr.mxu0 0.0
        %1738 = vmatpush1.msra.mxu0 0.0
        %1739 = vmatprep.subr.mxu0 0.0
        %1740 = vmatpush1.msra.mxu0 0.0
        %1741 = vmatprep.subr.mxu0 0.0
        %1742 = vmatpush1.msra.mxu0 0.0
        %1743 = vmatprep.mubr.f32.mxu0 0.0
        %1744 = vmatmul.mubr.f32.gmra.mrb[0].mxu0 %v1677
        %v1745 = vpop.f32.mrb[0].mxu0
        %v1746 = vadd.f32 0.0, %v1745
        %v1747 = vpop.f32.mrb[0].mxu0
        %1748 = vdwg.mxu0
        %v1749 = vmax.f32 %v1746, 0.0
        %v1750 = vld [vmem:[%s11] sm:$0xff]
        %v1751 = vld [vmem:[%s11 + $0x8] sm:$0xff]
        %v1752 = vld [vmem:[%s11 + $0x10] sm:$0xff]
        %v1753 = vld [vmem:[%s11 + $0x18] sm:$0xff]
        %v1754 = vld [vmem:[%s11 + $0x20] sm:$0xff]
        %v1755 = vld [vmem:[%s11 + $0x28] sm:$0xff]
        %v1756 = vld [vmem:[%s11 + $0x30] sm:$0xff]
        %v1757 = vld [vmem:[%s11 + $0x38] sm:$0xff]
        %v1759 = vsel %vm857, %v1749, 0
        %1761 = vmatprep.subr.mxu0 0.0
        %1762 = vmatpush1.msra.mxu0 %v1750
        %1763 = vmatprep.subr.mxu0 0.0
        %1764 = vmatpush1.msra.mxu0 %v1751
        %1765 = vmatprep.subr.mxu0 0.0
        %1766 = vmatpush1.msra.mxu0 %v1752
        %1767 = vmatprep.subr.mxu0 0.0
        %1768 = vmatpush1.msra.mxu0 %v1753
        %1769 = vmatprep.subr.mxu0 0.0
        %1770 = vmatpush1.msra.mxu0 %v1754
        %1771 = vmatprep.subr.mxu0 0.0
        %1772 = vmatpush1.msra.mxu0 %v1755
        %1773 = vmatprep.subr.mxu0 0.0
        %1774 = vmatpush1.msra.mxu0 %v1756
        %1775 = vmatprep.subr.mxu0 0.0
        %1776 = vmatpush1.msra.mxu0 %v1757
        %1777 = vmatprep.subr.mxu0 0.0
        %1778 = vmatpush1.msra.mxu0 0.0
        %1779 = vmatprep.subr.mxu0 0.0
        %1780 = vmatpush1.msra.mxu0 0.0
        %1781 = vmatprep.subr.mxu0 0.0
        %1782 = vmatpush1.msra.mxu0 0.0
        %1783 = vmatprep.subr.mxu0 0.0
        %1784 = vmatpush1.msra.mxu0 0.0
        %1785 = vmatprep.subr.mxu0 0.0
        %1786 = vmatpush1.msra.mxu0 0.0
        %1787 = vmatprep.subr.mxu0 0.0
        %1788 = vmatpush1.msra.mxu0 0.0
        %1789 = vmatprep.subr.mxu0 0.0
        %1790 = vmatpush1.msra.mxu0 0.0
        %1791 = vmatprep.subr.mxu0 0.0
        %1792 = vmatpush1.msra.mxu0 0.0
        %1793 = vmatprep.subr.mxu0 0.0
        %1794 = vmatpush1.msra.mxu0 0.0
        %1795 = vmatprep.subr.mxu0 0.0
        %1796 = vmatpush1.msra.mxu0 0.0
        %1797 = vmatprep.subr.mxu0 0.0
        %1798 = vmatpush1.msra.mxu0 0.0
        %1799 = vmatprep.subr.mxu0 0.0
        %1800 = vmatpush1.msra.mxu0 0.0
        %1801 = vmatprep.subr.mxu0 0.0
        %1802 = vmatpush1.msra.mxu0 0.0
        %1803 = vmatprep.subr.mxu0 0.0
        %1804 = vmatpush1.msra.mxu0 0.0
        %1805 = vmatprep.subr.mxu0 0.0
        %1806 = vmatpush1.msra.mxu0 0.0
        %1807 = vmatprep.subr.mxu0 0.0
        %1808 = vmatpush1.msra.mxu0 0.0
        %1809 = vmatprep.subr.mxu0 0.0
        %1810 = vmatpush1.msra.mxu0 0.0
        %1811 = vmatprep.subr.mxu0 0.0
        %1812 = vmatpush1.msra.mxu0 0.0
        %1813 = vmatprep.subr.mxu0 0.0
        %1814 = vmatpush1.msra.mxu0 0.0
        %1815 = vmatprep.subr.mxu0 0.0
        %1816 = vmatpush1.msra.mxu0 0.0
        %1817 = vmatprep.subr.mxu0 0.0
        %1818 = vmatpush1.msra.mxu0 0.0
        %1819 = vmatprep.subr.mxu0 0.0
        %1820 = vmatpush1.msra.mxu0 0.0
        %1821 = vmatprep.subr.mxu0 0.0
        %1822 = vmatpush1.msra.mxu0 0.0
        %1823 = vmatprep.subr.mxu0 0.0
        %1824 = vmatpush1.msra.mxu0 0.0
        %1825 = vmatprep.mubr.f32.mxu0 0.0
        %1826 = vmatmul.mubr.f32.gmra.mrb[0].mxu0 %v1759
        %v1827 = vpop.f32.mrb[0].mxu0
        %v1828 = vadd.f32 0.0, %v1827
        %v1829 = vpop.f32.mrb[0].mxu0
        %1830 = vdwg.mxu0
        %v1831 = vmax.f32 %v1828, 0.0
        %v1832 = vld [vmem:[%s12] sm:$0xff]
        %v1833 = vld [vmem:[%s12 + $0x8] sm:$0xff]
        %v1834 = vld [vmem:[%s12 + $0x10] sm:$0xff]
        %v1835 = vld [vmem:[%s12 + $0x18] sm:$0xff]
        %v1836 = vld [vmem:[%s12 + $0x20] sm:$0xff]
        %v1837 = vld [vmem:[%s12 + $0x28] sm:$0xff]
        %v1838 = vld [vmem:[%s12 + $0x30] sm:$0xff]
        %v1839 = vld [vmem:[%s12 + $0x38] sm:$0xff]
        %v1841 = vsel %vm857, %v1831, 0
        %1843 = vmatprep.subr.mxu0 0.0
        %1844 = vmatpush1.msra.mxu0 %v1832
        %1845 = vmatprep.subr.mxu0 0.0
        %1846 = vmatpush1.msra.mxu0 %v1833
        %1847 = vmatprep.subr.mxu0 0.0
        %1848 = vmatpush1.msra.mxu0 %v1834
        %1849 = vmatprep.subr.mxu0 0.0
        %1850 = vmatpush1.msra.mxu0 %v1835
        %1851 = vmatprep.subr.mxu0 0.0
        %1852 = vmatpush1.msra.mxu0 %v1836
        %1853 = vmatprep.subr.mxu0 0.0
        %1854 = vmatpush1.msra.mxu0 %v1837
        %1855 = vmatprep.subr.mxu0 0.0
        %1856 = vmatpush1.msra.mxu0 %v1838
        %1857 = vmatprep.subr.mxu0 0.0
        %1858 = vmatpush1.msra.mxu0 %v1839
        %1859 = vmatprep.subr.mxu0 0.0
        %1860 = vmatpush1.msra.mxu0 0.0
        %1861 = vmatprep.subr.mxu0 0.0
        %1862 = vmatpush1.msra.mxu0 0.0
        %1863 = vmatprep.subr.mxu0 0.0
        %1864 = vmatpush1.msra.mxu0 0.0
        %1865 = vmatprep.subr.mxu0 0.0
        %1866 = vmatpush1.msra.mxu0 0.0
        %1867 = vmatprep.subr.mxu0 0.0
        %1868 = vmatpush1.msra.mxu0 0.0
        %1869 = vmatprep.subr.mxu0 0.0
        %1870 = vmatpush1.msra.mxu0 0.0
        %1871 = vmatprep.subr.mxu0 0.0
        %1872 = vmatpush1.msra.mxu0 0.0
        %1873 = vmatprep.subr.mxu0 0.0
        %1874 = vmatpush1.msra.mxu0 0.0
        %1875 = vmatprep.subr.mxu0 0.0
        %1876 = vmatpush1.msra.mxu0 0.0
        %1877 = vmatprep.subr.mxu0 0.0
        %1878 = vmatpush1.msra.mxu0 0.0
        %1879 = vmatprep.subr.mxu0 0.0
        %1880 = vmatpush1.msra.mxu0 0.0
        %1881 = vmatprep.subr.mxu0 0.0
        %1882 = vmatpush1.msra.mxu0 0.0
        %1883 = vmatprep.subr.mxu0 0.0
        %1884 = vmatpush1.msra.mxu0 0.0
        %1885 = vmatprep.subr.mxu0 0.0
        %1886 = vmatpush1.msra.mxu0 0.0
        %1887 = vmatprep.subr.mxu0 0.0
        %1888 = vmatpush1.msra.mxu0 0.0
        %1889 = vmatprep.subr.mxu0 0.0
        %1890 = vmatpush1.msra.mxu0 0.0
        %1891 = vmatprep.subr.mxu0 0.0
        %1892 = vmatpush1.msra.mxu0 0.0
        %1893 = vmatprep.subr.mxu0 0.0
        %1894 = vmatpush1.msra.mxu0 0.0
        %1895 = vmatprep.subr.mxu0 0.0
        %1896 = vmatpush1.msra.mxu0 0.0
        %1897 = vmatprep.subr.mxu0 0.0
        %1898 = vmatpush1.msra.mxu0 0.0
        %1899 = vmatprep.subr.mxu0 0.0
        %1900 = vmatpush1.msra.mxu0 0.0
        %1901 = vmatprep.subr.mxu0 0.0
        %1902 = vmatpush1.msra.mxu0 0.0
        %1903 = vmatprep.subr.mxu0 0.0
        %1904 = vmatpush1.msra.mxu0 0.0
        %1905 = vmatprep.subr.mxu0 0.0
        %1906 = vmatpush1.msra.mxu0 0.0
        %1907 = vmatprep.mubr.f32.mxu0 0.0
        %1908 = vmatmul.mubr.f32.gmra.mrb[0].mxu0 %v1841
        %v1909 = vpop.f32.mrb[0].mxu0
        %v1910 = vadd.f32 0.0, %v1909
        %v1911 = vpop.f32.mrb[0].mxu0
        %1912 = vdwg.mxu0
        %v1913 = vxor.u32 %v1910, 2147483648
        %v1914 = vmul.f32 %v1913, 1.442695
        %v1915 = vpow.pop %v1914
        %v1916 = vadd.f32 %v1915, 1.0
        %v1917 = vrcp.pop %v1916
        %v1918 = vmul.f32 1.0, %v1917
        %1919 = vrot.lane.b32.xlu0 %v1576, 4
        %v1920 = vpop.permute.xlu0 %1919
        %v1922 = vsel %vm573, %v1918, %v1557
        %v1923 = vsel %vm1423, %v1922, %v1560
        %vm1924 = vcmask 39936
        %v1925 = vsel %vm1924, %v1923, %v1920
        %vm1926 = vcmask 162816
        %v1927 = vsel %vm1926, %v1925, 0.0
        %1928 = vst [vmem:[%s517] sm:$0xff] %v1927
        %1929 = vst.msk [vmem:[%s551] sm:$0xff] %vm1554, %v1431
        %s1930 = sand.u32 %s335, 1
        %s1931 = scalar_lea.sflag [#allocation3], %s1930
        %s1932 = sand.u32 %s335, 1
        %s1933 = smul.addr %s1932, 8
        %s1934 = scalar_lea.vmem [#allocation2], %s1933
        %p1935 = scmp.lt.s32.totalorder %s29, 1
        %s1936 = scalar_select %p1935, %s29, 1
        %s1937 = smul.addr %s1936, 8
        %s1938 = scalar_lea.vmem %s14, %s1937
        // Predicated region
        $region73: #{tpu_custom_call.1} parent=71 // pred_check
          %p1939 = pneg %p345
        $region74: #{tpu_custom_call.1} parent=71 // pred_check_branch
          %1941 = sbr.rel (%p1939) target = $region76
        $region75: #{tpu_custom_call.1} parent=71 // pred_region
          %s1943 = ssub.s32 128, 128
          %1944 = vsyncadd %s1931, %s1943
          %s1945 = smul.addr %s29, 128
          %s1946 = scalar_lea.hbm %s13, %s1945
          %s1948 = sshll.u32 %s1934, 4
          %s1949 = int_to_ptr.vmem [resolvable:$true] %s1948
          %1951 = dma.vmem_to_hbm [thread:$0]  %s1949, 128, %s1946, %s1931
        $region76: #{tpu_custom_call.1} parent=71 // pred_fallthru
          _
        // Predicated region
        $region77: #{tpu_custom_call.1} parent=71 // pred_check
          %p1952 = pneg %p371
        $region78: #{tpu_custom_call.1} parent=71 // pred_check_branch
          %1954 = sbr.rel (%p1952) target = $region80
        $region79: #{tpu_custom_call.1} parent=71 // pred_region
          _
        $region80: #{tpu_custom_call.1} parent=71 // pred_fallthru
          _
      $region72: #{tpu_custom_call.1} parent=5 // pred_fallthru
        _
      %p1955 = scmp.le.s32.totalorder 2, %s24
      // Predicated region
      $region81: #{tpu_custom_call.1} parent=5 // pred_check
        %p1956 = pneg %p1955
      $region82: #{tpu_custom_call.1} parent=5 // pred_check_branch
        %1958 = sbr.rel (%p1956) target = $region84
      $region83: #{tpu_custom_call.1} parent=5 // pred_region
        %s1959 = ssub.s32 %s24, 2
        // Predicated region
        $region85: #{tpu_custom_call.1} parent=83 // pred_check
          %p1960 = pneg %p351
        $region86: #{tpu_custom_call.1} parent=83 // pred_check_branch
          %1962 = sbr.rel (%p1960) target = $region88
        $region87: #{tpu_custom_call.1} parent=83 // pred_region
          %s1963 = sand.u32 %s336, 1
          %s1964 = scalar_lea.sflag [#allocation3], %s1963
          %s1965 = sand.u32 %s336, 1
          %s1966 = smul.addr %s1965, 8
          %s1967 = scalar_lea.vmem [#allocation2], %s1966
          %1968 = dma.done %s1964, 128
        $region88: #{tpu_custom_call.1} parent=83 // pred_fallthru
          _
        // Predicated region
        $region89: #{tpu_custom_call.1} parent=83 // pred_check
          %p1969 = pneg %p377
        $region90: #{tpu_custom_call.1} parent=83 // pred_check_branch
          %1971 = sbr.rel (%p1969) target = $region92
        $region91: #{tpu_custom_call.1} parent=83 // pred_region
          %p1972 = scmp.lt.s32.totalorder %s30, 1
          %s1973 = scalar_select %p1972, %s30, 1
          %s1974 = smul.addr %s1973, 8
          %s1975 = scalar_lea.vmem %s14, %s1974
        $region92: #{tpu_custom_call.1} parent=83 // pred_fallthru
          _
      $region84: #{tpu_custom_call.1} parent=5 // pred_fallthru
        _
    $region6: #{tpu_custom_call.1} parent=1 // loop_footer
      %s28 = sadd.s32 1, %s24
    $region7: #{tpu_custom_call.1} parent=1 // loop_footer_branch
      %23 = sbr.rel target = $region3
    $region8: #{tpu_custom_call.1} parent=1 // loop_exit
      _
    %1976 = vsyncpa [#allocation3], 1
    %s1977 = scalar_lea.sflag [#allocation3], 1
    %1978 = vsyncpa %s1977, 1

</llo_original>
